<compile_context>
chip_gen: v7x
topology: tpu7x:2x2x1
jax: 0.10.0
libtpu: 0.0.40
codegen_flags: <defaults>
</compile_context>

<pallas_src>
import jax
import jax.numpy as jnp
from jax.experimental import pallas as pl
from jax.experimental.pallas import tpu as pltpu

D_IN = 3 * 32 * 32            # fixed by x.view(-1, 3*32*32)
LANES = 128                   # lane-dense output width


def _round_up(x, m):
    return ((x + m - 1) // m) * m


def _fcn_kernel(x_ref, w1_ref, b1_ref, w2_ref, b2_ref, w3_ref, b3_ref, o_ref):
    # x tile arrives as f32 (no wrapper-side cast pass); cast to bf16 on the VPU,
    # which has huge slack in this HBM-bound kernel. Weights are bf16; all dots
    # accumulate in f32; bias add / ReLU stay f32.
    x = x_ref[...].astype(jnp.bfloat16)
    h1 = jnp.dot(x, w1_ref[...], preferred_element_type=jnp.float32) + b1_ref[...]
    h1 = jnp.maximum(h1, 0.0)                                  # .clamp(min=0)
    h2 = jnp.dot(h1.astype(jnp.bfloat16), w2_ref[...],
                 preferred_element_type=jnp.float32) + b2_ref[...]
    h2 = jnp.maximum(h2, 0.0)                                  # .clamp(min=0)
    y = jnp.dot(h2.astype(jnp.bfloat16), w3_ref[...],
                preferred_element_type=jnp.float32) + b3_ref[...]
    o_ref[...] = y.astype(o_ref.dtype)                         # (TILE_M, 128) lane-dense


def _pick_tile_m(N):
    # Multiple of 16 (bf16 sublane packing). Big tiles amortize per-step overhead
    # and improve DMA efficiency (256->512 measured ~63%->85% of HBM roofline),
    # but keep at least 2 grid steps once there is enough work so the "parallel"
    # batch axis actually feeds both TensorCores on v7x.
    if N <= 256:
        return _round_up(max(N, 1), 16)
    return min(512, _round_up(pl.cdiv(N, 2), 16))


def fcn_forward(x, w1, b1, w2, b2, w3, b3):
    """x: (N, 3, 32, 32) float32 (or already flat (N, 3072)). Returns (N, D_out) f32."""
    x2d = x.reshape(-1, D_IN)                                  # == torch .view(-1, 3*32*32)
    N = x2d.shape[0]
    H1 = w1.shape[1]
    H2 = w2.shape[1]
    D_out = w3.shape[1]
    D_pad = _round_up(D_out, LANES)                            # lane-dense output slab

    TILE_M = _pick_tile_m(N)
    grid = (pl.cdiv(N, TILE_M),)                               # ragged last block is masked

    # HBM-side dtypes: x stays f32 (cast in-kernel), weights bf16, biases f32.
    w1_bf = w1.astype(jnp.bfloat16)
    w2_bf = w2.astype(jnp.bfloat16)
    w3_bf = jnp.pad(w3, ((0, 0), (0, D_pad - D_out))).astype(jnp.bfloat16)
    b1_f = b1.astype(jnp.float32)
    b2_f = b2.astype(jnp.float32)
    b3_f = jnp.pad(b3.astype(jnp.float32), ((0, 0), (0, D_pad - D_out)))

    flops = 2 * N * (D_IN * H1 + H1 * H2 + H2 * D_pad)
    bytes_accessed = (
        N * D_IN * 4                                           # x read (f32)
        + N * D_pad * 4                                        # out write (f32)
        + (D_IN * H1 + H1 * H2 + H2 * D_pad) * 2               # bf16 weights
        + (H1 + H2 + D_pad) * 4                                # f32 biases
    )

    out_padded = pl.pallas_call(
        _fcn_kernel,
        out_shape=jax.ShapeDtypeStruct((N, D_pad), jnp.float32),
        grid_spec=pltpu.PrefetchScalarGridSpec(
            num_scalar_prefetch=0,
            grid=grid,
            in_specs=[
                pl.BlockSpec((TILE_M, D_IN), lambda i: (i, 0)),   # x: streamed per tile
                pl.BlockSpec((D_IN, H1), lambda i: (0, 0)),       # w1: VMEM-resident
                pl.BlockSpec((1, H1), lambda i: (0, 0)),          # b1: resident
                pl.BlockSpec((H1, H2), lambda i: (0, 0)),         # w2: resident
                pl.BlockSpec((1, H2), lambda i: (0, 0)),          # b2: resident
                pl.BlockSpec((H2, D_pad), lambda i: (0, 0)),      # w3 (padded): resident
                pl.BlockSpec((1, D_pad), lambda i: (0, 0)),       # b3 (padded): resident
            ],
            out_specs=pl.BlockSpec((TILE_M, D_pad), lambda i: (i, 0)),
        ),
        compiler_params=pltpu.CompilerParams(
            dimension_semantics=("parallel",),          # shards batch across TCs on v7x
            vmem_limit_bytes=48 * 1024 * 1024,          # ~15 MiB used at TILE_M=512; safe on 64 MiB v7x
        ),
        cost_estimate=pl.CostEstimate(
            flops=flops, transcendentals=0, bytes_accessed=bytes_accessed),
    )(x2d, w1_bf, b1_f, w2_bf, b2_f, w3_bf, b3_f)

    # Only the padded lanes are dropped (no padded rows exist anymore).
    return out_padded[:, :D_out]


def init_params(key, D_in, H1, H2, D_out):
    """Deterministic synthetic init (uniform, torch-Linear-like scale).
    Weights stored as (in, out); biases as (1, out) for 2-D broadcasting."""
    ks = jax.random.split(key, 6)

    def lin(kw, kb, fan_in, fan_out):
        bound = 1.0 / (fan_in ** 0.5)
        w = jax.random.uniform(kw, (fan_in, fan_out), jnp.float32, -bound, bound)
        b = jax.random.uniform(kb, (1, fan_out), jnp.float32, -bound, bound)
        return w, b

    w1, b1 = lin(ks[0], ks[1], D_in, H1)
    w2, b2 = lin(ks[2], ks[3], H1, H2)
    w3, b3 = lin(ks[4], ks[5], H2, D_out)
    return w1, b1, w2, b2, w3, b3


if __name__ == "__main__":
    # D_in is fixed by the forward pass (view(-1, 3*32*32)); other dims kept small.
    N, H1, H2, D_out = 2, 128, 64, 10

    key = jax.random.PRNGKey(0)
    k_x, k_p = jax.random.split(key)
    x = jax.random.normal(k_x, (N, 3, 32, 32), jnp.float32)
    params = init_params(k_p, D_IN, H1, H2, D_out)

    y = fcn_forward(x, *params)
    jax.block_until_ready(y)

    # Pure-JAX f32 reference; kernel uses bf16 weights/activations with f32
    # accumulation, so allow ~1e-2-level tolerance.
    w1, b1, w2, b2, w3, b3 = params
    x2d = x.reshape(-1, D_IN)
    ref = jnp.maximum(x2d @ w1 + b1, 0.0)
    ref = jnp.maximum(ref @ w2 + b2, 0.0)
    ref = ref @ w3 + b3

    assert y.shape == (N, D_out)
    assert jnp.allclose(y, ref, atol=2e-2, rtol=2e-2), float(jnp.max(jnp.abs(y - ref)))

    print("KERNEL_OK")
</pallas_src>

<mosaic_0001>
module attributes {stable_mosaic.version = 11 : i64} {
  func.func @_fcn_kernel(%arg0: i32, %arg1: memref<16x3072xf32, #tpu.memory_space<vmem>>, %arg2: memref<3072x128xbf16, #tpu.memory_space<vmem>>, %arg3: memref<1x128xf32, #tpu.memory_space<vmem>>, %arg4: memref<128x64xbf16, #tpu.memory_space<vmem>>, %arg5: memref<1x64xf32, #tpu.memory_space<vmem>>, %arg6: memref<64x128xbf16, #tpu.memory_space<vmem>>, %arg7: memref<1x128xf32, #tpu.memory_space<vmem>>, %arg8: memref<16x128xf32, #tpu.memory_space<vmem>>) attributes {dimension_semantics = [#tpu.dimension_semantics<parallel>], iteration_bounds = array<i64: 1>, scalar_prefetch = 0 : i64, scratch_operands = 0 : i64, tpu.core_type = #tpu.core_type<tc>, window_params = [{transform_indices = @transform_0, window_bounds = array<i64: 16, 3072>}, {pipeline_mode = #tpu.pipeline_mode<synchronous>, transform_indices = @transform_1, window_bounds = array<i64: 3072, 128>}, {pipeline_mode = #tpu.pipeline_mode<synchronous>, transform_indices = @transform_2, window_bounds = array<i64: 1, 128>}, {pipeline_mode = #tpu.pipeline_mode<synchronous>, transform_indices = @transform_3, window_bounds = array<i64: 128, 64>}, {pipeline_mode = #tpu.pipeline_mode<synchronous>, transform_indices = @transform_4, window_bounds = array<i64: 1, 64>}, {pipeline_mode = #tpu.pipeline_mode<synchronous>, transform_indices = @transform_5, window_bounds = array<i64: 64, 128>}, {pipeline_mode = #tpu.pipeline_mode<synchronous>, transform_indices = @transform_6, window_bounds = array<i64: 1, 128>}, {transform_indices = @transform_7, window_bounds = array<i64: 16, 128>}]} {
    %c0 = arith.constant 0 : index
    %c0_0 = arith.constant 0 : index
    %0 = vector.load %arg1[%c0, %c0_0] : memref<16x3072xf32, #tpu.memory_space<vmem>>, vector<16x3072xf32>
    %1 = arith.truncf %0 : vector<16x3072xf32> to vector<16x3072xbf16>
    %c0_1 = arith.constant 0 : index
    %c0_2 = arith.constant 0 : index
    %2 = vector.load %arg2[%c0_1, %c0_2] : memref<3072x128xbf16, #tpu.memory_space<vmem>>, vector<3072x128xbf16>
    %cst = arith.constant dense<0.000000e+00> : vector<16x128xf32>
    %3 = tpu.matmul %1, %2, %cst {dimension_numbers = #tpu.dot_dimension_numbers<[1], [0], [0], [1], [0, 0, 1, 1], [], []>} : vector<16x3072xbf16>, vector<3072x128xbf16>, vector<16x128xf32> -> vector<16x128xf32>
    %c0_3 = arith.constant 0 : index
    %c0_4 = arith.constant 0 : index
    %4 = vector.load %arg3[%c0_3, %c0_4] : memref<1x128xf32, #tpu.memory_space<vmem>>, vector<1x128xf32>
    %5 = vector.broadcast %4 : vector<1x128xf32> to vector<16x128xf32>
    %6 = arith.addf %3, %5 : vector<16x128xf32>
    %cst_5 = arith.constant 0.000000e+00 : f32
    %7 = vector.broadcast %cst_5 : f32 to vector<16x128xf32>
    %8 = arith.maximumf %6, %7 : vector<16x128xf32>
    %9 = arith.truncf %8 : vector<16x128xf32> to vector<16x128xbf16>
    %c0_6 = arith.constant 0 : index
    %c0_7 = arith.constant 0 : index
    %10 = vector.load %arg4[%c0_6, %c0_7] : memref<128x64xbf16, #tpu.memory_space<vmem>>, vector<128x64xbf16>
    %cst_8 = arith.constant dense<0.000000e+00> : vector<16x64xf32>
    %11 = tpu.matmul %9, %10, %cst_8 {dimension_numbers = #tpu.dot_dimension_numbers<[1], [0], [0], [1], [0, 0, 1, 1], [], []>} : vector<16x128xbf16>, vector<128x64xbf16>, vector<16x64xf32> -> vector<16x64xf32>
    %c0_9 = arith.constant 0 : index
    %c0_10 = arith.constant 0 : index
    %12 = vector.load %arg5[%c0_9, %c0_10] : memref<1x64xf32, #tpu.memory_space<vmem>>, vector<1x64xf32>
    %13 = vector.broadcast %12 : vector<1x64xf32> to vector<16x64xf32>
    %14 = arith.addf %11, %13 : vector<16x64xf32>
    %cst_11 = arith.constant 0.000000e+00 : f32
    %15 = vector.broadcast %cst_11 : f32 to vector<16x64xf32>
    %16 = arith.maximumf %14, %15 : vector<16x64xf32>
    %17 = arith.truncf %16 : vector<16x64xf32> to vector<16x64xbf16>
    %c0_12 = arith.constant 0 : index
    %c0_13 = arith.constant 0 : index
    %18 = vector.load %arg6[%c0_12, %c0_13] : memref<64x128xbf16, #tpu.memory_space<vmem>>, vector<64x128xbf16>
    %cst_14 = arith.constant dense<0.000000e+00> : vector<16x128xf32>
    %19 = tpu.matmul %17, %18, %cst_14 {dimension_numbers = #tpu.dot_dimension_numbers<[1], [0], [0], [1], [0, 0, 1, 1], [], []>} : vector<16x64xbf16>, vector<64x128xbf16>, vector<16x128xf32> -> vector<16x128xf32>
    %c0_15 = arith.constant 0 : index
    %c0_16 = arith.constant 0 : index
    %20 = vector.load %arg7[%c0_15, %c0_16] : memref<1x128xf32, #tpu.memory_space<vmem>>, vector<1x128xf32>
    %21 = vector.broadcast %20 : vector<1x128xf32> to vector<16x128xf32>
    %22 = arith.addf %19, %21 : vector<16x128xf32>
    %c0_17 = arith.constant 0 : index
    %c0_18 = arith.constant 0 : index
    %23 = vector.load %arg8[%c0_17, %c0_18] : memref<16x128xf32, #tpu.memory_space<vmem>>, vector<16x128xf32>
    tpu.vector_store %arg8[%c0_17, %c0_18], %22 {strides = array<i32>} : memref<16x128xf32, #tpu.memory_space<vmem>>, vector<16x128xf32>,
    return
  }
  func.func @transform_0(%arg0: i32) -> (i32, i32) {
    %c0_i32 = arith.constant 0 : i32
    %c0_i32_0 = arith.constant 0 : i32
    return %arg0, %c0_i32 : i32, i32
  }
  func.func @transform_1(%arg0: i32) -> (i32, i32) {
    %c0_i32 = arith.constant 0 : i32
    %c0_i32_0 = arith.constant 0 : i32
    %c0_i32_1 = arith.constant 0 : i32
    return %c0_i32, %c0_i32_0 : i32, i32
  }
  func.func @transform_2(%arg0: i32) -> (i32, i32) {
    %c0_i32 = arith.constant 0 : i32
    %c0_i32_0 = arith.constant 0 : i32
    %c0_i32_1 = arith.constant 0 : i32
    return %c0_i32, %c0_i32_0 : i32, i32
  }
  func.func @transform_3(%arg0: i32) -> (i32, i32) {
    %c0_i32 = arith.constant 0 : i32
    %c0_i32_0 = arith.constant 0 : i32
    %c0_i32_1 = arith.constant 0 : i32
    return %c0_i32, %c0_i32_0 : i32, i32
  }
  func.func @transform_4(%arg0: i32) -> (i32, i32) {
    %c0_i32 = arith.constant 0 : i32
    %c0_i32_0 = arith.constant 0 : i32
    %c0_i32_1 = arith.constant 0 : i32
    return %c0_i32, %c0_i32_0 : i32, i32
  }
  func.func @transform_5(%arg0: i32) -> (i32, i32) {
    %c0_i32 = arith.constant 0 : i32
    %c0_i32_0 = arith.constant 0 : i32
    %c0_i32_1 = arith.constant 0 : i32
    return %c0_i32, %c0_i32_0 : i32, i32
  }
  func.func @transform_6(%arg0: i32) -> (i32, i32) {
    %c0_i32 = arith.constant 0 : i32
    %c0_i32_0 = arith.constant 0 : i32
    %c0_i32_1 = arith.constant 0 : i32
    return %c0_i32, %c0_i32_0 : i32, i32
  }
  func.func @transform_7(%arg0: i32) -> (i32, i32) {
    %c0_i32 = arith.constant 0 : i32
    %c0_i32_0 = arith.constant 0 : i32
    return %arg0, %c0_i32 : i32, i32
  }
}

</mosaic_0001>

<llo_original>
// kernel: tpu_custom_call.1
$region0: #{tpu_custom_call.1}
  #allocation0 [shape = 'u32[]', space=smem, size = 0x4, offset = 0x4, fixed_abs, tag = 'smem constant byte address 0x4 - core index']
  #allocation1 [shape = 'u32[144,128]{1,0:T(1,128)}', space=vmem, size = 0x12000, scoped, tag = 'internal scratch']
  %s0 = inlined_call_operand.vmem [shape: f32[2,3072], index: 0, kind: input, shape index: {}]
  %s1 = inlined_call_operand.hbm [shape: bf16[3072,128], index: 1, kind: input, shape index: {}]
  %s2 = inlined_call_operand.vmem [shape: f32[1,128], index: 2, kind: input, shape index: {}]
  %s3 = inlined_call_operand.vmem [shape: bf16[128,64], index: 3, kind: input, shape index: {}]
  %s4 = inlined_call_operand.vmem [shape: f32[1,64], index: 4, kind: input, shape index: {}]
  %s5 = inlined_call_operand.vmem [shape: bf16[64,128], index: 5, kind: input, shape index: {}]
  %s6 = inlined_call_operand.vmem [shape: f32[1,128], index: 6, kind: input, shape index: {}]
  %s7 = inlined_call_operand.hbm [shape: f32[2,128], index: 7, kind: output, shape index: {}]
  %s8 = sld [smem:[#allocation0]]
  $region42: #{tpu_custom_call.1} parent=0
    _
  %s10 = ssub.s32 1, %s8
  %s11 = scalar_select 0, %s10, %s8
  $region1: #{tpu_custom_call.1} parent=0
    #allocation2 [shape = 'u8[786432]{0}', space=vmem, size = 0xc0000, scoped, tag = 'input window, operand 1, single buffered']
    #allocation3 [shape = 's32[1]{0}', space=sflag, size = 0x4, scoped, tag = 'scoped memory for tpu_custom_call.1']
    #allocation4 [shape = 's32[1]{0}', space=sflag, size = 0x4, scoped, tag = 'scoped memory for tpu_custom_call.1']
    #allocation5 [shape = 'u8[8192]{0}', space=vmem, size = 0x2000, scoped, tag = 'output window, operand 0, single buffered']
    %12 = vsyncpa [#allocation3], 0
    %13 = vsyncpa [#allocation4], 0
    // Predicated region
    $region2: #{tpu_custom_call.1} parent=1 // pred_check
      _
    $region3: #{tpu_custom_call.1} parent=1 // pred_check_branch
      %15 = sbr.rel (0) target = $region5
    $region4: #{tpu_custom_call.1} parent=1 // pred_region
      _
    $region5: #{tpu_custom_call.1} parent=1 // pred_fallthru
      _
    // Predicated region
    $region6: #{tpu_custom_call.1} parent=1 // pred_check
      _
    $region7: #{tpu_custom_call.1} parent=1 // pred_check_branch
      %17 = sbr.rel (0) target = $region9
    $region8: #{tpu_custom_call.1} parent=1 // pred_region
      %s19 = ssub.s32 24576, 24576
      %20 = vsyncadd [#allocation3], %s19
      %s21 = sshll.u32 [#allocation2], 4
      %s22 = int_to_ptr.vmem [resolvable:$true] %s21
      %27 = dma.hbm_to_vmem [thread:$0]  %s1, 24576, %s22, [#allocation3], 64, 64, 4
    $region9: #{tpu_custom_call.1} parent=1 // pred_fallthru
      _
    // Predicated region
    $region10: #{tpu_custom_call.1} parent=1 // pred_check
      _
    $region11: #{tpu_custom_call.1} parent=1 // pred_check_branch
      %29 = sbr.rel (0) target = $region13
    $region12: #{tpu_custom_call.1} parent=1 // pred_region
      _
    $region13: #{tpu_custom_call.1} parent=1 // pred_fallthru
      _
    // Predicated region
    $region14: #{tpu_custom_call.1} parent=1 // pred_check
      _
    $region15: #{tpu_custom_call.1} parent=1 // pred_check_branch
      %31 = sbr.rel (0) target = $region17
    $region16: #{tpu_custom_call.1} parent=1 // pred_region
      _
    $region17: #{tpu_custom_call.1} parent=1 // pred_fallthru
      _
    // Predicated region
    $region18: #{tpu_custom_call.1} parent=1 // pred_check
      _
    $region19: #{tpu_custom_call.1} parent=1 // pred_check_branch
      %33 = sbr.rel (0) target = $region21
    $region20: #{tpu_custom_call.1} parent=1 // pred_region
      _
    $region21: #{tpu_custom_call.1} parent=1 // pred_fallthru
      _
    // Predicated region
    $region22: #{tpu_custom_call.1} parent=1 // pred_check
      _
    $region23: #{tpu_custom_call.1} parent=1 // pred_check_branch
      %35 = sbr.rel (0) target = $region25
    $region24: #{tpu_custom_call.1} parent=1 // pred_region
      _
    $region25: #{tpu_custom_call.1} parent=1 // pred_fallthru
      _
    // Predicated region
    $region26: #{tpu_custom_call.1} parent=1 // pred_check
      _
    $region27: #{tpu_custom_call.1} parent=1 // pred_check_branch
      %37 = sbr.rel (0) target = $region29
    $region28: #{tpu_custom_call.1} parent=1 // pred_region
      _
    $region29: #{tpu_custom_call.1} parent=1 // pred_fallthru
      _
    // Predicated region
    $region30: #{tpu_custom_call.1} parent=1 // pred_check
      _
    $region31: #{tpu_custom_call.1} parent=1 // pred_check_branch
      %39 = sbr.rel (0) target = $region33
    $region32: #{tpu_custom_call.1} parent=1 // pred_region
      %40 = dma.done [#allocation3], 24576
    $region33: #{tpu_custom_call.1} parent=1 // pred_fallthru
      _
    %v42 = vld [vmem:[%s0] sm:$0xff]
    %v43 = vld [vmem:[%s0 + $0x8] sm:$0xff]
    %v44 = vld [vmem:[%s0 + $0x10] sm:$0xff]
    %v45 = vld [vmem:[%s0 + $0x18] sm:$0xff]
    %v46 = vld [vmem:[%s0 + $0x20] sm:$0xff]
    %v47 = vld [vmem:[%s0 + $0x28] sm:$0xff]
    %v48 = vld [vmem:[%s0 + $0x30] sm:$0xff]
    %v49 = vld [vmem:[%s0 + $0x38] sm:$0xff]
    %v50 = vld [vmem:[%s0 + $0x40] sm:$0xff]
    %v51 = vld [vmem:[%s0 + $0x48] sm:$0xff]
    %v52 = vld [vmem:[%s0 + $0x50] sm:$0xff]
    %v53 = vld [vmem:[%s0 + $0x58] sm:$0xff]
    %v54 = vld [vmem:[%s0 + $0x60] sm:$0xff]
    %v55 = vld [vmem:[%s0 + $0x68] sm:$0xff]
    %v56 = vld [vmem:[%s0 + $0x70] sm:$0xff]
    %v57 = vld [vmem:[%s0 + $0x78] sm:$0xff]
    %v58 = vld [vmem:[%s0 + $0x80] sm:$0xff]
    %v59 = vld [vmem:[%s0 + $0x88] sm:$0xff]
    %v60 = vld [vmem:[%s0 + $0x90] sm:$0xff]
    %v61 = vld [vmem:[%s0 + $0x98] sm:$0xff]
    %v62 = vld [vmem:[%s0 + $0xa0] sm:$0xff]
    %v63 = vld [vmem:[%s0 + $0xa8] sm:$0xff]
    %v64 = vld [vmem:[%s0 + $0xb0] sm:$0xff]
    %v65 = vld [vmem:[%s0 + $0xb8] sm:$0xff]
    %v66 = vld [vmem:[%s0 + $0xc0] sm:$0xff]
    %v67 = vld [vmem:[%s0 + $0xc8] sm:$0xff]
    %v68 = vld [vmem:[%s0 + $0xd0] sm:$0xff]
    %v69 = vld [vmem:[%s0 + $0xd8] sm:$0xff]
    %v70 = vld [vmem:[%s0 + $0xe0] sm:$0xff]
    %v71 = vld [vmem:[%s0 + $0xe8] sm:$0xff]
    %v72 = vld [vmem:[%s0 + $0xf0] sm:$0xff]
    %v73 = vld [vmem:[%s0 + $0xf8] sm:$0xff]
    %v74 = vld [vmem:[%s0 + $0x100] sm:$0xff]
    %v75 = vld [vmem:[%s0 + $0x108] sm:$0xff]
    %v76 = vld [vmem:[%s0 + $0x110] sm:$0xff]
    %v77 = vld [vmem:[%s0 + $0x118] sm:$0xff]
    %v78 = vld [vmem:[%s0 + $0x120] sm:$0xff]
    %v79 = vld [vmem:[%s0 + $0x128] sm:$0xff]
    %v80 = vld [vmem:[%s0 + $0x130] sm:$0xff]
    %v81 = vld [vmem:[%s0 + $0x138] sm:$0xff]
    %v82 = vld [vmem:[%s0 + $0x140] sm:$0xff]
    %v83 = vld [vmem:[%s0 + $0x148] sm:$0xff]
    %v84 = vld [vmem:[%s0 + $0x150] sm:$0xff]
    %v85 = vld [vmem:[%s0 + $0x158] sm:$0xff]
    %v86 = vld [vmem:[%s0 + $0x160] sm:$0xff]
    %v87 = vld [vmem:[%s0 + $0x168] sm:$0xff]
    %v88 = vld [vmem:[%s0 + $0x170] sm:$0xff]
    %v89 = vld [vmem:[%s0 + $0x178] sm:$0xff]
    %v138 = vcombine.low %v42, %v48
    %v139 = vcombine.high %v42, %v48
    %v140 = vcombine.low %v54, %v60
    %v141 = vcombine.high %v54, %v60
    %v143 = vunpack.c.l.s4 1983009808
    %v144 = vunpack.c.0.s8 %v143
    %v145 = vlaneseq
    %v146 = vshrl.u32 %v145, 7
    %v147 = vsub.s32 %v144, %v146
    %v148 = vrot.slane %v138, %v147
    %v150 = vunpack.c.l.s4 1983009808
    %v151 = vunpack.c.0.s8 %v150
    %v152 = vlaneseq
    %v153 = vshrl.u32 %v152, 7
    %v154 = vsub.s32 %v151, %v153
    %v155 = vrot.slane %v139, %v154
    %v157 = vunpack.c.l.s4 1983009808
    %v158 = vunpack.c.0.s8 %v157
    %v159 = vlaneseq
    %v160 = vshrl.u32 %v159, 7
    %v161 = vsub.s32 %v158, %v160
    %v162 = vrot.slane %v140, %v161
    %v164 = vunpack.c.l.s4 1983009808
    %v165 = vunpack.c.0.s8 %v164
    %v166 = vlaneseq
    %v167 = vshrl.u32 %v166, 7
    %v168 = vsub.s32 %v165, %v167
    %v169 = vrot.slane %v141, %v168
    %v170 = vcombine.low %v148, %v162
    %v171 = vcombine.high %v148, %v162
    %v172 = vcombine.low %v155, %v169
    %v173 = vcombine.high %v155, %v169
    %v174 = vcombine.low %v43, %v49
    %v175 = vcombine.high %v43, %v49
    %v176 = vcombine.low %v55, %v61
    %v177 = vcombine.high %v55, %v61
    %v179 = vunpack.c.l.s4 1983009808
    %v180 = vunpack.c.0.s8 %v179
    %v181 = vlaneseq
    %v182 = vshrl.u32 %v181, 7
    %v183 = vsub.s32 %v180, %v182
    %v184 = vrot.slane %v174, %v183
    %v186 = vunpack.c.l.s4 1983009808
    %v187 = vunpack.c.0.s8 %v186
    %v188 = vlaneseq
    %v189 = vshrl.u32 %v188, 7
    %v190 = vsub.s32 %v187, %v189
    %v191 = vrot.slane %v175, %v190
    %v193 = vunpack.c.l.s4 1983009808
    %v194 = vunpack.c.0.s8 %v193
    %v195 = vlaneseq
    %v196 = vshrl.u32 %v195, 7
    %v197 = vsub.s32 %v194, %v196
    %v198 = vrot.slane %v176, %v197
    %v200 = vunpack.c.l.s4 1983009808
    %v201 = vunpack.c.0.s8 %v200
    %v202 = vlaneseq
    %v203 = vshrl.u32 %v202, 7
    %v204 = vsub.s32 %v201, %v203
    %v205 = vrot.slane %v177, %v204
    %v206 = vcombine.low %v184, %v198
    %v207 = vcombine.high %v184, %v198
    %v208 = vcombine.low %v191, %v205
    %v209 = vcombine.high %v191, %v205
    %v210 = vcombine.low %v44, %v50
    %v211 = vcombine.high %v44, %v50
    %v212 = vcombine.low %v56, %v62
    %v213 = vcombine.high %v56, %v62
    %v215 = vunpack.c.l.s4 1983009808
    %v216 = vunpack.c.0.s8 %v215
    %v217 = vlaneseq
    %v218 = vshrl.u32 %v217, 7
    %v219 = vsub.s32 %v216, %v218
    %v220 = vrot.slane %v210, %v219
    %v222 = vunpack.c.l.s4 1983009808
    %v223 = vunpack.c.0.s8 %v222
    %v224 = vlaneseq
    %v225 = vshrl.u32 %v224, 7
    %v226 = vsub.s32 %v223, %v225
    %v227 = vrot.slane %v211, %v226
    %v229 = vunpack.c.l.s4 1983009808
    %v230 = vunpack.c.0.s8 %v229
    %v231 = vlaneseq
    %v232 = vshrl.u32 %v231, 7
    %v233 = vsub.s32 %v230, %v232
    %v234 = vrot.slane %v212, %v233
    %v236 = vunpack.c.l.s4 1983009808
    %v237 = vunpack.c.0.s8 %v236
    %v238 = vlaneseq
    %v239 = vshrl.u32 %v238, 7
    %v240 = vsub.s32 %v237, %v239
    %v241 = vrot.slane %v213, %v240
    %v242 = vcombine.low %v220, %v234
    %v243 = vcombine.high %v220, %v234
    %v244 = vcombine.low %v227, %v241
    %v245 = vcombine.high %v227, %v241
    %v246 = vcombine.low %v45, %v51
    %v247 = vcombine.high %v45, %v51
    %v248 = vcombine.low %v57, %v63
    %v249 = vcombine.high %v57, %v63
    %v251 = vunpack.c.l.s4 1983009808
    %v252 = vunpack.c.0.s8 %v251
    %v253 = vlaneseq
    %v254 = vshrl.u32 %v253, 7
    %v255 = vsub.s32 %v252, %v254
    %v256 = vrot.slane %v246, %v255
    %v258 = vunpack.c.l.s4 1983009808
    %v259 = vunpack.c.0.s8 %v258
    %v260 = vlaneseq
    %v261 = vshrl.u32 %v260, 7
    %v262 = vsub.s32 %v259, %v261
    %v263 = vrot.slane %v247, %v262
    %v265 = vunpack.c.l.s4 1983009808
    %v266 = vunpack.c.0.s8 %v265
    %v267 = vlaneseq
    %v268 = vshrl.u32 %v267, 7
    %v269 = vsub.s32 %v266, %v268
    %v270 = vrot.slane %v248, %v269
    %v272 = vunpack.c.l.s4 1983009808
    %v273 = vunpack.c.0.s8 %v272
    %v274 = vlaneseq
    %v275 = vshrl.u32 %v274, 7
    %v276 = vsub.s32 %v273, %v275
    %v277 = vrot.slane %v249, %v276
    %v278 = vcombine.low %v256, %v270
    %v279 = vcombine.high %v256, %v270
    %v280 = vcombine.low %v263, %v277
    %v281 = vcombine.high %v263, %v277
    %v282 = vcombine.low %v46, %v52
    %v283 = vcombine.high %v46, %v52
    %v284 = vcombine.low %v58, %v64
    %v285 = vcombine.high %v58, %v64
    %v287 = vunpack.c.l.s4 1983009808
    %v288 = vunpack.c.0.s8 %v287
    %v289 = vlaneseq
    %v290 = vshrl.u32 %v289, 7
    %v291 = vsub.s32 %v288, %v290
    %v292 = vrot.slane %v282, %v291
    %v294 = vunpack.c.l.s4 1983009808
    %v295 = vunpack.c.0.s8 %v294
    %v296 = vlaneseq
    %v297 = vshrl.u32 %v296, 7
    %v298 = vsub.s32 %v295, %v297
    %v299 = vrot.slane %v283, %v298
    %v301 = vunpack.c.l.s4 1983009808
    %v302 = vunpack.c.0.s8 %v301
    %v303 = vlaneseq
    %v304 = vshrl.u32 %v303, 7
    %v305 = vsub.s32 %v302, %v304
    %v306 = vrot.slane %v284, %v305
    %v308 = vunpack.c.l.s4 1983009808
    %v309 = vunpack.c.0.s8 %v308
    %v310 = vlaneseq
    %v311 = vshrl.u32 %v310, 7
    %v312 = vsub.s32 %v309, %v311
    %v313 = vrot.slane %v285, %v312
    %v314 = vcombine.low %v292, %v306
    %v315 = vcombine.high %v292, %v306
    %v316 = vcombine.low %v299, %v313
    %v317 = vcombine.high %v299, %v313
    %v318 = vcombine.low %v47, %v53
    %v319 = vcombine.high %v47, %v53
    %v320 = vcombine.low %v59, %v65
    %v321 = vcombine.high %v59, %v65
    %v323 = vunpack.c.l.s4 1983009808
    %v324 = vunpack.c.0.s8 %v323
    %v325 = vlaneseq
    %v326 = vshrl.u32 %v325, 7
    %v327 = vsub.s32 %v324, %v326
    %v328 = vrot.slane %v318, %v327
    %v330 = vunpack.c.l.s4 1983009808
    %v331 = vunpack.c.0.s8 %v330
    %v332 = vlaneseq
    %v333 = vshrl.u32 %v332, 7
    %v334 = vsub.s32 %v331, %v333
    %v335 = vrot.slane %v319, %v334
    %v337 = vunpack.c.l.s4 1983009808
    %v338 = vunpack.c.0.s8 %v337
    %v339 = vlaneseq
    %v340 = vshrl.u32 %v339, 7
    %v341 = vsub.s32 %v338, %v340
    %v342 = vrot.slane %v320, %v341
    %v344 = vunpack.c.l.s4 1983009808
    %v345 = vunpack.c.0.s8 %v344
    %v346 = vlaneseq
    %v347 = vshrl.u32 %v346, 7
    %v348 = vsub.s32 %v345, %v347
    %v349 = vrot.slane %v321, %v348
    %v350 = vcombine.low %v328, %v342
    %v351 = vcombine.high %v328, %v342
    %v352 = vcombine.low %v335, %v349
    %v353 = vcombine.high %v335, %v349
    %v354 = vcombine.low %v66, %v72
    %v355 = vcombine.high %v66, %v72
    %v356 = vcombine.low %v78, %v84
    %v357 = vcombine.high %v78, %v84
    %v359 = vunpack.c.l.s4 1983009808
    %v360 = vunpack.c.0.s8 %v359
    %v361 = vlaneseq
    %v362 = vshrl.u32 %v361, 7
    %v363 = vsub.s32 %v360, %v362
    %v364 = vrot.slane %v354, %v363
    %v366 = vunpack.c.l.s4 1983009808
    %v367 = vunpack.c.0.s8 %v366
    %v368 = vlaneseq
    %v369 = vshrl.u32 %v368, 7
    %v370 = vsub.s32 %v367, %v369
    %v371 = vrot.slane %v355, %v370
    %v373 = vunpack.c.l.s4 1983009808
    %v374 = vunpack.c.0.s8 %v373
    %v375 = vlaneseq
    %v376 = vshrl.u32 %v375, 7
    %v377 = vsub.s32 %v374, %v376
    %v378 = vrot.slane %v356, %v377
    %v380 = vunpack.c.l.s4 1983009808
    %v381 = vunpack.c.0.s8 %v380
    %v382 = vlaneseq
    %v383 = vshrl.u32 %v382, 7
    %v384 = vsub.s32 %v381, %v383
    %v385 = vrot.slane %v357, %v384
    %v386 = vcombine.low %v364, %v378
    %v387 = vcombine.high %v364, %v378
    %v388 = vcombine.low %v371, %v385
    %v389 = vcombine.high %v371, %v385
    %v390 = vcombine.low %v67, %v73
    %v391 = vcombine.high %v67, %v73
    %v392 = vcombine.low %v79, %v85
    %v393 = vcombine.high %v79, %v85
    %v395 = vunpack.c.l.s4 1983009808
    %v396 = vunpack.c.0.s8 %v395
    %v397 = vlaneseq
    %v398 = vshrl.u32 %v397, 7
    %v399 = vsub.s32 %v396, %v398
    %v400 = vrot.slane %v390, %v399
    %v402 = vunpack.c.l.s4 1983009808
    %v403 = vunpack.c.0.s8 %v402
    %v404 = vlaneseq
    %v405 = vshrl.u32 %v404, 7
    %v406 = vsub.s32 %v403, %v405
    %v407 = vrot.slane %v391, %v406
    %v409 = vunpack.c.l.s4 1983009808
    %v410 = vunpack.c.0.s8 %v409
    %v411 = vlaneseq
    %v412 = vshrl.u32 %v411, 7
    %v413 = vsub.s32 %v410, %v412
    %v414 = vrot.slane %v392, %v413
    %v416 = vunpack.c.l.s4 1983009808
    %v417 = vunpack.c.0.s8 %v416
    %v418 = vlaneseq
    %v419 = vshrl.u32 %v418, 7
    %v420 = vsub.s32 %v417, %v419
    %v421 = vrot.slane %v393, %v420
    %v422 = vcombine.low %v400, %v414
    %v423 = vcombine.high %v400, %v414
    %v424 = vcombine.low %v407, %v421
    %v425 = vcombine.high %v407, %v421
    %v426 = vcombine.low %v68, %v74
    %v427 = vcombine.high %v68, %v74
    %v428 = vcombine.low %v80, %v86
    %v429 = vcombine.high %v80, %v86
    %v431 = vunpack.c.l.s4 1983009808
    %v432 = vunpack.c.0.s8 %v431
    %v433 = vlaneseq
    %v434 = vshrl.u32 %v433, 7
    %v435 = vsub.s32 %v432, %v434
    %v436 = vrot.slane %v426, %v435
    %v438 = vunpack.c.l.s4 1983009808
    %v439 = vunpack.c.0.s8 %v438
    %v440 = vlaneseq
    %v441 = vshrl.u32 %v440, 7
    %v442 = vsub.s32 %v439, %v441
    %v443 = vrot.slane %v427, %v442
    %v445 = vunpack.c.l.s4 1983009808
    %v446 = vunpack.c.0.s8 %v445
    %v447 = vlaneseq
    %v448 = vshrl.u32 %v447, 7
    %v449 = vsub.s32 %v446, %v448
    %v450 = vrot.slane %v428, %v449
    %v452 = vunpack.c.l.s4 1983009808
    %v453 = vunpack.c.0.s8 %v452
    %v454 = vlaneseq
    %v455 = vshrl.u32 %v454, 7
    %v456 = vsub.s32 %v453, %v455
    %v457 = vrot.slane %v429, %v456
    %v458 = vcombine.low %v436, %v450
    %v459 = vcombine.high %v436, %v450
    %v460 = vcombine.low %v443, %v457
    %v461 = vcombine.high %v443, %v457
    %v462 = vcombine.low %v69, %v75
    %v463 = vcombine.high %v69, %v75
    %v464 = vcombine.low %v81, %v87
    %v465 = vcombine.high %v81, %v87
    %v467 = vunpack.c.l.s4 1983009808
    %v468 = vunpack.c.0.s8 %v467
    %v469 = vlaneseq
    %v470 = vshrl.u32 %v469, 7
    %v471 = vsub.s32 %v468, %v470
    %v472 = vrot.slane %v462, %v471
    %v474 = vunpack.c.l.s4 1983009808
    %v475 = vunpack.c.0.s8 %v474
    %v476 = vlaneseq
    %v477 = vshrl.u32 %v476, 7
    %v478 = vsub.s32 %v475, %v477
    %v479 = vrot.slane %v463, %v478
    %v481 = vunpack.c.l.s4 1983009808
    %v482 = vunpack.c.0.s8 %v481
    %v483 = vlaneseq
    %v484 = vshrl.u32 %v483, 7
    %v485 = vsub.s32 %v482, %v484
    %v486 = vrot.slane %v464, %v485
    %v488 = vunpack.c.l.s4 1983009808
    %v489 = vunpack.c.0.s8 %v488
    %v490 = vlaneseq
    %v491 = vshrl.u32 %v490, 7
    %v492 = vsub.s32 %v489, %v491
    %v493 = vrot.slane %v465, %v492
    %v494 = vcombine.low %v472, %v486
    %v495 = vcombine.high %v472, %v486
    %v496 = vcombine.low %v479, %v493
    %v497 = vcombine.high %v479, %v493
    %v498 = vcombine.low %v70, %v76
    %v499 = vcombine.high %v70, %v76
    %v500 = vcombine.low %v82, %v88
    %v501 = vcombine.high %v82, %v88
    %v503 = vunpack.c.l.s4 1983009808
    %v504 = vunpack.c.0.s8 %v503
    %v505 = vlaneseq
    %v506 = vshrl.u32 %v505, 7
    %v507 = vsub.s32 %v504, %v506
    %v508 = vrot.slane %v498, %v507
    %v510 = vunpack.c.l.s4 1983009808
    %v511 = vunpack.c.0.s8 %v510
    %v512 = vlaneseq
    %v513 = vshrl.u32 %v512, 7
    %v514 = vsub.s32 %v511, %v513
    %v515 = vrot.slane %v499, %v514
    %v517 = vunpack.c.l.s4 1983009808
    %v518 = vunpack.c.0.s8 %v517
    %v519 = vlaneseq
    %v520 = vshrl.u32 %v519, 7
    %v521 = vsub.s32 %v518, %v520
    %v522 = vrot.slane %v500, %v521
    %v524 = vunpack.c.l.s4 1983009808
    %v525 = vunpack.c.0.s8 %v524
    %v526 = vlaneseq
    %v527 = vshrl.u32 %v526, 7
    %v528 = vsub.s32 %v525, %v527
    %v529 = vrot.slane %v501, %v528
    %v530 = vcombine.low %v508, %v522
    %v531 = vcombine.high %v508, %v522
    %v532 = vcombine.low %v515, %v529
    %v533 = vcombine.high %v515, %v529
    %v534 = vcombine.low %v71, %v77
    %v535 = vcombine.high %v71, %v77
    %v536 = vcombine.low %v83, %v89
    %v537 = vcombine.high %v83, %v89
    %v539 = vunpack.c.l.s4 1983009808
    %v540 = vunpack.c.0.s8 %v539
    %v541 = vlaneseq
    %v542 = vshrl.u32 %v541, 7
    %v543 = vsub.s32 %v540, %v542
    %v544 = vrot.slane %v534, %v543
    %v546 = vunpack.c.l.s4 1983009808
    %v547 = vunpack.c.0.s8 %v546
    %v548 = vlaneseq
    %v549 = vshrl.u32 %v548, 7
    %v550 = vsub.s32 %v547, %v549
    %v551 = vrot.slane %v535, %v550
    %v553 = vunpack.c.l.s4 1983009808
    %v554 = vunpack.c.0.s8 %v553
    %v555 = vlaneseq
    %v556 = vshrl.u32 %v555, 7
    %v557 = vsub.s32 %v554, %v556
    %v558 = vrot.slane %v536, %v557
    %v560 = vunpack.c.l.s4 1983009808
    %v561 = vunpack.c.0.s8 %v560
    %v562 = vlaneseq
    %v563 = vshrl.u32 %v562, 7
    %v564 = vsub.s32 %v561, %v563
    %v565 = vrot.slane %v537, %v564
    %v566 = vcombine.low %v544, %v558
    %v567 = vcombine.high %v544, %v558
    %v568 = vcombine.low %v551, %v565
    %v569 = vcombine.high %v551, %v565
    %v618 = vpack.c.bf16 %v386, %v170
    %v619 = vpack.c.bf16 %v387, %v171
    %v620 = vpack.c.bf16 %v388, %v172
    %v621 = vpack.c.bf16 %v389, %v173
    %v622 = vpack.c.bf16 %v422, %v206
    %v623 = vpack.c.bf16 %v423, %v207
    %v624 = vpack.c.bf16 %v424, %v208
    %v625 = vpack.c.bf16 %v425, %v209
    %v626 = vpack.c.bf16 %v458, %v242
    %v627 = vpack.c.bf16 %v459, %v243
    %v628 = vpack.c.bf16 %v460, %v244
    %v629 = vpack.c.bf16 %v461, %v245
    %v630 = vpack.c.bf16 %v494, %v278
    %v631 = vpack.c.bf16 %v495, %v279
    %v632 = vpack.c.bf16 %v496, %v280
    %v633 = vpack.c.bf16 %v497, %v281
    %v634 = vpack.c.bf16 %v530, %v314
    %v635 = vpack.c.bf16 %v531, %v315
    %v636 = vpack.c.bf16 %v532, %v316
    %v637 = vpack.c.bf16 %v533, %v317
    %v638 = vpack.c.bf16 %v566, %v350
    %v639 = vpack.c.bf16 %v567, %v351
    %v640 = vpack.c.bf16 %v568, %v352
    %v641 = vpack.c.bf16 %v569, %v353
    %v642 = vld [vmem:[#allocation2] sm:$0xf]
    %v643 = vld [vmem:[#allocation2 + $0x4] sm:$0xf]
    %v644 = vld [vmem:[#allocation2 + $0x8] sm:$0xf]
    %v645 = vld [vmem:[#allocation2 + $0xc] sm:$0xf]
    %v646 = vld [vmem:[#allocation2 + $0x10] sm:$0xf]
    %v647 = vld [vmem:[#allocation2 + $0x14] sm:$0xf]
    %v648 = vld [vmem:[#allocation2 + $0x18] sm:$0xf]
    %v649 = vld [vmem:[#allocation2 + $0x1c] sm:$0xf]
    %v650 = vld [vmem:[#allocation2 + $0x20] sm:$0xf]
    %v651 = vld [vmem:[#allocation2 + $0x24] sm:$0xf]
    %v652 = vld [vmem:[#allocation2 + $0x28] sm:$0xf]
    %v653 = vld [vmem:[#allocation2 + $0x2c] sm:$0xf]
    %v654 = vld [vmem:[#allocation2 + $0x30] sm:$0xf]
    %v655 = vld [vmem:[#allocation2 + $0x34] sm:$0xf]
    %v656 = vld [vmem:[#allocation2 + $0x38] sm:$0xf]
    %v657 = vld [vmem:[#allocation2 + $0x3c] sm:$0xf]
    %v658 = vld [vmem:[#allocation2 + $0x40] sm:$0xf]
    %v659 = vld [vmem:[#allocation2 + $0x44] sm:$0xf]
    %v660 = vld [vmem:[#allocation2 + $0x48] sm:$0xf]
    %v661 = vld [vmem:[#allocation2 + $0x4c] sm:$0xf]
    %v662 = vld [vmem:[#allocation2 + $0x50] sm:$0xf]
    %v663 = vld [vmem:[#allocation2 + $0x54] sm:$0xf]
    %v664 = vld [vmem:[#allocation2 + $0x58] sm:$0xf]
    %v665 = vld [vmem:[#allocation2 + $0x5c] sm:$0xf]
    %v666 = vld [vmem:[#allocation2 + $0x60] sm:$0xf]
    %v667 = vld [vmem:[#allocation2 + $0x64] sm:$0xf]
    %v668 = vld [vmem:[#allocation2 + $0x68] sm:$0xf]
    %v669 = vld [vmem:[#allocation2 + $0x6c] sm:$0xf]
    %v670 = vld [vmem:[#allocation2 + $0x70] sm:$0xf]
    %v671 = vld [vmem:[#allocation2 + $0x74] sm:$0xf]
    %v672 = vld [vmem:[#allocation2 + $0x78] sm:$0xf]
    %v673 = vld [vmem:[#allocation2 + $0x7c] sm:$0xf]
    %v674 = vld [vmem:[#allocation2 + $0x80] sm:$0xf]
    %v675 = vld [vmem:[#allocation2 + $0x84] sm:$0xf]
    %v676 = vld [vmem:[#allocation2 + $0x88] sm:$0xf]
    %v677 = vld [vmem:[#allocation2 + $0x8c] sm:$0xf]
    %v678 = vld [vmem:[#allocation2 + $0x90] sm:$0xf]
    %v679 = vld [vmem:[#allocation2 + $0x94] sm:$0xf]
    %v680 = vld [vmem:[#allocation2 + $0x98] sm:$0xf]
    %v681 = vld [vmem:[#allocation2 + $0x9c] sm:$0xf]
    %v682 = vld [vmem:[#allocation2 + $0xa0] sm:$0xf]
    %v683 = vld [vmem:[#allocation2 + $0xa4] sm:$0xf]
    %v684 = vld [vmem:[#allocation2 + $0xa8] sm:$0xf]
    %v685 = vld [vmem:[#allocation2 + $0xac] sm:$0xf]
    %v686 = vld [vmem:[#allocation2 + $0xb0] sm:$0xf]
    %v687 = vld [vmem:[#allocation2 + $0xb4] sm:$0xf]
    %v688 = vld [vmem:[#allocation2 + $0xb8] sm:$0xf]
    %v689 = vld [vmem:[#allocation2 + $0xbc] sm:$0xf]
    %v690 = vld [vmem:[#allocation2 + $0xc0] sm:$0xf]
    %v691 = vld [vmem:[#allocation2 + $0xc4] sm:$0xf]
    %v692 = vld [vmem:[#allocation2 + $0xc8] sm:$0xf]
    %v693 = vld [vmem:[#allocation2 + $0xcc] sm:$0xf]
    %v694 = vld [vmem:[#allocation2 + $0xd0] sm:$0xf]
    %v695 = vld [vmem:[#allocation2 + $0xd4] sm:$0xf]
    %v696 = vld [vmem:[#allocation2 + $0xd8] sm:$0xf]
    %v697 = vld [vmem:[#allocation2 + $0xdc] sm:$0xf]
    %v698 = vld [vmem:[#allocation2 + $0xe0] sm:$0xf]
    %v699 = vld [vmem:[#allocation2 + $0xe4] sm:$0xf]
    %v700 = vld [vmem:[#allocation2 + $0xe8] sm:$0xf]
    %v701 = vld [vmem:[#allocation2 + $0xec] sm:$0xf]
    %v702 = vld [vmem:[#allocation2 + $0xf0] sm:$0xf]
    %v703 = vld [vmem:[#allocation2 + $0xf4] sm:$0xf]
    %v704 = vld [vmem:[#allocation2 + $0xf8] sm:$0xf]
    %v705 = vld [vmem:[#allocation2 + $0xfc] sm:$0xf]
    %v706 = vld [vmem:[#allocation2 + $0x100] sm:$0xf]
    %v707 = vld [vmem:[#allocation2 + $0x104] sm:$0xf]
    %v708 = vld [vmem:[#allocation2 + $0x108] sm:$0xf]
    %v709 = vld [vmem:[#allocation2 + $0x10c] sm:$0xf]
    %v710 = vld [vmem:[#allocation2 + $0x110] sm:$0xf]
    %v711 = vld [vmem:[#allocation2 + $0x114] sm:$0xf]
    %v712 = vld [vmem:[#allocation2 + $0x118] sm:$0xf]
    %v713 = vld [vmem:[#allocation2 + $0x11c] sm:$0xf]
    %v714 = vld [vmem:[#allocation2 + $0x120] sm:$0xf]
    %v715 = vld [vmem:[#allocation2 + $0x124] sm:$0xf]
    %v716 = vld [vmem:[#allocation2 + $0x128] sm:$0xf]
    %v717 = vld [vmem:[#allocation2 + $0x12c] sm:$0xf]
    %v718 = vld [vmem:[#allocation2 + $0x130] sm:$0xf]
    %v719 = vld [vmem:[#allocation2 + $0x134] sm:$0xf]
    %v720 = vld [vmem:[#allocation2 + $0x138] sm:$0xf]
    %v721 = vld [vmem:[#allocation2 + $0x13c] sm:$0xf]
    %v722 = vld [vmem:[#allocation2 + $0x140] sm:$0xf]
    %v723 = vld [vmem:[#allocation2 + $0x144] sm:$0xf]
    %v724 = vld [vmem:[#allocation2 + $0x148] sm:$0xf]
    %v725 = vld [vmem:[#allocation2 + $0x14c] sm:$0xf]
    %v726 = vld [vmem:[#allocation2 + $0x150] sm:$0xf]
    %v727 = vld [vmem:[#allocation2 + $0x154] sm:$0xf]
    %v728 = vld [vmem:[#allocation2 + $0x158] sm:$0xf]
    %v729 = vld [vmem:[#allocation2 + $0x15c] sm:$0xf]
    %v730 = vld [vmem:[#allocation2 + $0x160] sm:$0xf]
    %v731 = vld [vmem:[#allocation2 + $0x164] sm:$0xf]
    %v732 = vld [vmem:[#allocation2 + $0x168] sm:$0xf]
    %v733 = vld [vmem:[#allocation2 + $0x16c] sm:$0xf]
    %v734 = vld [vmem:[#allocation2 + $0x170] sm:$0xf]
    %v735 = vld [vmem:[#allocation2 + $0x174] sm:$0xf]
    %v736 = vld [vmem:[#allocation2 + $0x178] sm:$0xf]
    %v737 = vld [vmem:[#allocation2 + $0x17c] sm:$0xf]
    %v738 = vld [vmem:[#allocation2 + $0x180] sm:$0xf]
    %v739 = vld [vmem:[#allocation2 + $0x184] sm:$0xf]
    %v740 = vld [vmem:[#allocation2 + $0x188] sm:$0xf]
    %v741 = vld [vmem:[#allocation2 + $0x18c] sm:$0xf]
    %v742 = vld [vmem:[#allocation2 + $0x190] sm:$0xf]
    %v743 = vld [vmem:[#allocation2 + $0x194] sm:$0xf]
    %v744 = vld [vmem:[#allocation2 + $0x198] sm:$0xf]
    %v745 = vld [vmem:[#allocation2 + $0x19c] sm:$0xf]
    %v746 = vld [vmem:[#allocation2 + $0x1a0] sm:$0xf]
    %v747 = vld [vmem:[#allocation2 + $0x1a4] sm:$0xf]
    %v748 = vld [vmem:[#allocation2 + $0x1a8] sm:$0xf]
    %v749 = vld [vmem:[#allocation2 + $0x1ac] sm:$0xf]
    %v750 = vld [vmem:[#allocation2 + $0x1b0] sm:$0xf]
    %v751 = vld [vmem:[#allocation2 + $0x1b4] sm:$0xf]
    %v752 = vld [vmem:[#allocation2 + $0x1b8] sm:$0xf]
    %v753 = vld [vmem:[#allocation2 + $0x1bc] sm:$0xf]
    %v754 = vld [vmem:[#allocation2 + $0x1c0] sm:$0xf]
    %v755 = vld [vmem:[#allocation2 + $0x1c4] sm:$0xf]
    %v756 = vld [vmem:[#allocation2 + $0x1c8] sm:$0xf]
    %v757 = vld [vmem:[#allocation2 + $0x1cc] sm:$0xf]
    %v758 = vld [vmem:[#allocation2 + $0x1d0] sm:$0xf]
    %v759 = vld [vmem:[#allocation2 + $0x1d4] sm:$0xf]
    %v760 = vld [vmem:[#allocation2 + $0x1d8] sm:$0xf]
    %v761 = vld [vmem:[#allocation2 + $0x1dc] sm:$0xf]
    %v762 = vld [vmem:[#allocation2 + $0x1e0] sm:$0xf]
    %v763 = vld [vmem:[#allocation2 + $0x1e4] sm:$0xf]
    %v764 = vld [vmem:[#allocation2 + $0x1e8] sm:$0xf]
    %v765 = vld [vmem:[#allocation2 + $0x1ec] sm:$0xf]
    %v766 = vld [vmem:[#allocation2 + $0x1f0] sm:$0xf]
    %v767 = vld [vmem:[#allocation2 + $0x1f4] sm:$0xf]
    %v768 = vld [vmem:[#allocation2 + $0x1f8] sm:$0xf]
    %v769 = vld [vmem:[#allocation2 + $0x1fc] sm:$0xf]
    %v770 = vld [vmem:[#allocation2 + $0x200] sm:$0xf]
    %v771 = vld [vmem:[#allocation2 + $0x204] sm:$0xf]
    %v772 = vld [vmem:[#allocation2 + $0x208] sm:$0xf]
    %v773 = vld [vmem:[#allocation2 + $0x20c] sm:$0xf]
    %v774 = vld [vmem:[#allocation2 + $0x210] sm:$0xf]
    %v775 = vld [vmem:[#allocation2 + $0x214] sm:$0xf]
    %v776 = vld [vmem:[#allocation2 + $0x218] sm:$0xf]
    %v777 = vld [vmem:[#allocation2 + $0x21c] sm:$0xf]
    %v778 = vld [vmem:[#allocation2 + $0x220] sm:$0xf]
    %v779 = vld [vmem:[#allocation2 + $0x224] sm:$0xf]
    %v780 = vld [vmem:[#allocation2 + $0x228] sm:$0xf]
    %v781 = vld [vmem:[#allocation2 + $0x22c] sm:$0xf]
    %v782 = vld [vmem:[#allocation2 + $0x230] sm:$0xf]
    %v783 = vld [vmem:[#allocation2 + $0x234] sm:$0xf]
    %v784 = vld [vmem:[#allocation2 + $0x238] sm:$0xf]
    %v785 = vld [vmem:[#allocation2 + $0x23c] sm:$0xf]
    %v786 = vld [vmem:[#allocation2 + $0x240] sm:$0xf]
    %v787 = vld [vmem:[#allocation2 + $0x244] sm:$0xf]
    %v788 = vld [vmem:[#allocation2 + $0x248] sm:$0xf]
    %v789 = vld [vmem:[#allocation2 + $0x24c] sm:$0xf]
    %v790 = vld [vmem:[#allocation2 + $0x250] sm:$0xf]
    %v791 = vld [vmem:[#allocation2 + $0x254] sm:$0xf]
    %v792 = vld [vmem:[#allocation2 + $0x258] sm:$0xf]
    %v793 = vld [vmem:[#allocation2 + $0x25c] sm:$0xf]
    %v794 = vld [vmem:[#allocation2 + $0x260] sm:$0xf]
    %v795 = vld [vmem:[#allocation2 + $0x264] sm:$0xf]
    %v796 = vld [vmem:[#allocation2 + $0x268] sm:$0xf]
    %v797 = vld [vmem:[#allocation2 + $0x26c] sm:$0xf]
    %v798 = vld [vmem:[#allocation2 + $0x270] sm:$0xf]
    %v799 = vld [vmem:[#allocation2 + $0x274] sm:$0xf]
    %v800 = vld [vmem:[#allocation2 + $0x278] sm:$0xf]
    %v801 = vld [vmem:[#allocation2 + $0x27c] sm:$0xf]
    %v802 = vld [vmem:[#allocation2 + $0x280] sm:$0xf]
    %v803 = vld [vmem:[#allocation2 + $0x284] sm:$0xf]
    %v804 = vld [vmem:[#allocation2 + $0x288] sm:$0xf]
    %v805 = vld [vmem:[#allocation2 + $0x28c] sm:$0xf]
    %v806 = vld [vmem:[#allocation2 + $0x290] sm:$0xf]
    %v807 = vld [vmem:[#allocation2 + $0x294] sm:$0xf]
    %v808 = vld [vmem:[#allocation2 + $0x298] sm:$0xf]
    %v809 = vld [vmem:[#allocation2 + $0x29c] sm:$0xf]
    %v810 = vld [vmem:[#allocation2 + $0x2a0] sm:$0xf]
    %v811 = vld [vmem:[#allocation2 + $0x2a4] sm:$0xf]
    %v812 = vld [vmem:[#allocation2 + $0x2a8] sm:$0xf]
    %v813 = vld [vmem:[#allocation2 + $0x2ac] sm:$0xf]
    %v814 = vld [vmem:[#allocation2 + $0x2b0] sm:$0xf]
    %v815 = vld [vmem:[#allocation2 + $0x2b4] sm:$0xf]
    %v816 = vld [vmem:[#allocation2 + $0x2b8] sm:$0xf]
    %v817 = vld [vmem:[#allocation2 + $0x2bc] sm:$0xf]
    %v818 = vld [vmem:[#allocation2 + $0x2c0] sm:$0xf]
    %v819 = vld [vmem:[#allocation2 + $0x2c4] sm:$0xf]
    %v820 = vld [vmem:[#allocation2 + $0x2c8] sm:$0xf]
    %v821 = vld [vmem:[#allocation2 + $0x2cc] sm:$0xf]
    %v822 = vld [vmem:[#allocation2 + $0x2d0] sm:$0xf]
    %v823 = vld [vmem:[#allocation2 + $0x2d4] sm:$0xf]
    %v824 = vld [vmem:[#allocation2 + $0x2d8] sm:$0xf]
    %v825 = vld [vmem:[#allocation2 + $0x2dc] sm:$0xf]
    %v826 = vld [vmem:[#allocation2 + $0x2e0] sm:$0xf]
    %v827 = vld [vmem:[#allocation2 + $0x2e4] sm:$0xf]
    %v828 = vld [vmem:[#allocation2 + $0x2e8] sm:$0xf]
    %v829 = vld [vmem:[#allocation2 + $0x2ec] sm:$0xf]
    %v830 = vld [vmem:[#allocation2 + $0x2f0] sm:$0xf]
    %v831 = vld [vmem:[#allocation2 + $0x2f4] sm:$0xf]
    %v832 = vld [vmem:[#allocation2 + $0x2f8] sm:$0xf]
    %v833 = vld [vmem:[#allocation2 + $0x2fc] sm:$0xf]
    %v834 = vld [vmem:[#allocation2 + $0x300] sm:$0xf]
    %v835 = vld [vmem:[#allocation2 + $0x304] sm:$0xf]
    %v836 = vld [vmem:[#allocation2 + $0x308] sm:$0xf]
    %v837 = vld [vmem:[#allocation2 + $0x30c] sm:$0xf]
    %v838 = vld [vmem:[#allocation2 + $0x310] sm:$0xf]
    %v839 = vld [vmem:[#allocation2 + $0x314] sm:$0xf]
    %v840 = vld [vmem:[#allocation2 + $0x318] sm:$0xf]
    %v841 = vld [vmem:[#allocation2 + $0x31c] sm:$0xf]
    %v842 = vld [vmem:[#allocation2 + $0x320] sm:$0xf]
    %v843 = vld [vmem:[#allocation2 + $0x324] sm:$0xf]
    %v844 = vld [vmem:[#allocation2 + $0x328] sm:$0xf]
    %v845 = vld [vmem:[#allocation2 + $0x32c] sm:$0xf]
    %v846 = vld [vmem:[#allocation2 + $0x330] sm:$0xf]
    %v847 = vld [vmem:[#allocation2 + $0x334] sm:$0xf]
    %v848 = vld [vmem:[#allocation2 + $0x338] sm:$0xf]
    %v849 = vld [vmem:[#allocation2 + $0x33c] sm:$0xf]
    %v850 = vld [vmem:[#allocation2 + $0x340] sm:$0xf]
    %v851 = vld [vmem:[#allocation2 + $0x344] sm:$0xf]
    %v852 = vld [vmem:[#allocation2 + $0x348] sm:$0xf]
    %v853 = vld [vmem:[#allocation2 + $0x34c] sm:$0xf]
    %v854 = vld [vmem:[#allocation2 + $0x350] sm:$0xf]
    %v855 = vld [vmem:[#allocation2 + $0x354] sm:$0xf]
    %v856 = vld [vmem:[#allocation2 + $0x358] sm:$0xf]
    %v857 = vld [vmem:[#allocation2 + $0x35c] sm:$0xf]
    %v858 = vld [vmem:[#allocation2 + $0x360] sm:$0xf]
    %v859 = vld [vmem:[#allocation2 + $0x364] sm:$0xf]
    %v860 = vld [vmem:[#allocation2 + $0x368] sm:$0xf]
    %v861 = vld [vmem:[#allocation2 + $0x36c] sm:$0xf]
    %v862 = vld [vmem:[#allocation2 + $0x370] sm:$0xf]
    %v863 = vld [vmem:[#allocation2 + $0x374] sm:$0xf]
    %v864 = vld [vmem:[#allocation2 + $0x378] sm:$0xf]
    %v865 = vld [vmem:[#allocation2 + $0x37c] sm:$0xf]
    %v866 = vld [vmem:[#allocation2 + $0x380] sm:$0xf]
    %v867 = vld [vmem:[#allocation2 + $0x384] sm:$0xf]
    %v868 = vld [vmem:[#allocation2 + $0x388] sm:$0xf]
    %v869 = vld [vmem:[#allocation2 + $0x38c] sm:$0xf]
    %v870 = vld [vmem:[#allocation2 + $0x390] sm:$0xf]
    %v871 = vld [vmem:[#allocation2 + $0x394] sm:$0xf]
    %v872 = vld [vmem:[#allocation2 + $0x398] sm:$0xf]
    %v873 = vld [vmem:[#allocation2 + $0x39c] sm:$0xf]
    %v874 = vld [vmem:[#allocation2 + $0x3a0] sm:$0xf]
    %v875 = vld [vmem:[#allocation2 + $0x3a4] sm:$0xf]
    %v876 = vld [vmem:[#allocation2 + $0x3a8] sm:$0xf]
    %v877 = vld [vmem:[#allocation2 + $0x3ac] sm:$0xf]
    %v878 = vld [vmem:[#allocation2 + $0x3b0] sm:$0xf]
    %v879 = vld [vmem:[#allocation2 + $0x3b4] sm:$0xf]
    %v880 = vld [vmem:[#allocation2 + $0x3b8] sm:$0xf]
    %v881 = vld [vmem:[#allocation2 + $0x3bc] sm:$0xf]
    %v882 = vld [vmem:[#allocation2 + $0x3c0] sm:$0xf]
    %v883 = vld [vmem:[#allocation2 + $0x3c4] sm:$0xf]
    %v884 = vld [vmem:[#allocation2 + $0x3c8] sm:$0xf]
    %v885 = vld [vmem:[#allocation2 + $0x3cc] sm:$0xf]
    %v886 = vld [vmem:[#allocation2 + $0x3d0] sm:$0xf]
    %v887 = vld [vmem:[#allocation2 + $0x3d4] sm:$0xf]
    %v888 = vld [vmem:[#allocation2 + $0x3d8] sm:$0xf]
    %v889 = vld [vmem:[#allocation2 + $0x3dc] sm:$0xf]
    %v890 = vld [vmem:[#allocation2 + $0x3e0] sm:$0xf]
    %v891 = vld [vmem:[#allocation2 + $0x3e4] sm:$0xf]
    %v892 = vld [vmem:[#allocation2 + $0x3e8] sm:$0xf]
    %v893 = vld [vmem:[#allocation2 + $0x3ec] sm:$0xf]
    %v894 = vld [vmem:[#allocation2 + $0x3f0] sm:$0xf]
    %v895 = vld [vmem:[#allocation2 + $0x3f4] sm:$0xf]
    %v896 = vld [vmem:[#allocation2 + $0x3f8] sm:$0xf]
    %v897 = vld [vmem:[#allocation2 + $0x3fc] sm:$0xf]
    %v898 = vld [vmem:[#allocation2 + $0x400] sm:$0xf]
    %v899 = vld [vmem:[#allocation2 + $0x404] sm:$0xf]
    %v900 = vld [vmem:[#allocation2 + $0x408] sm:$0xf]
    %v901 = vld [vmem:[#allocation2 + $0x40c] sm:$0xf]
    %v902 = vld [vmem:[#allocation2 + $0x410] sm:$0xf]
    %v903 = vld [vmem:[#allocation2 + $0x414] sm:$0xf]
    %v904 = vld [vmem:[#allocation2 + $0x418] sm:$0xf]
    %v905 = vld [vmem:[#allocation2 + $0x41c] sm:$0xf]
    %v906 = vld [vmem:[#allocation2 + $0x420] sm:$0xf]
    %v907 = vld [vmem:[#allocation2 + $0x424] sm:$0xf]
    %v908 = vld [vmem:[#allocation2 + $0x428] sm:$0xf]
    %v909 = vld [vmem:[#allocation2 + $0x42c] sm:$0xf]
    %v910 = vld [vmem:[#allocation2 + $0x430] sm:$0xf]
    %v911 = vld [vmem:[#allocation2 + $0x434] sm:$0xf]
    %v912 = vld [vmem:[#allocation2 + $0x438] sm:$0xf]
    %v913 = vld [vmem:[#allocation2 + $0x43c] sm:$0xf]
    %v914 = vld [vmem:[#allocation2 + $0x440] sm:$0xf]
    %v915 = vld [vmem:[#allocation2 + $0x444] sm:$0xf]
    %v916 = vld [vmem:[#allocation2 + $0x448] sm:$0xf]
    %v917 = vld [vmem:[#allocation2 + $0x44c] sm:$0xf]
    %v918 = vld [vmem:[#allocation2 + $0x450] sm:$0xf]
    %v919 = vld [vmem:[#allocation2 + $0x454] sm:$0xf]
    %v920 = vld [vmem:[#allocation2 + $0x458] sm:$0xf]
    %v921 = vld [vmem:[#allocation2 + $0x45c] sm:$0xf]
    %v922 = vld [vmem:[#allocation2 + $0x460] sm:$0xf]
    %v923 = vld [vmem:[#allocation2 + $0x464] sm:$0xf]
    %v924 = vld [vmem:[#allocation2 + $0x468] sm:$0xf]
    %v925 = vld [vmem:[#allocation2 + $0x46c] sm:$0xf]
    %v926 = vld [vmem:[#allocation2 + $0x470] sm:$0xf]
    %v927 = vld [vmem:[#allocation2 + $0x474] sm:$0xf]
    %v928 = vld [vmem:[#allocation2 + $0x478] sm:$0xf]
    %v929 = vld [vmem:[#allocation2 + $0x47c] sm:$0xf]
    %v930 = vld [vmem:[#allocation2 + $0x480] sm:$0xf]
    %v931 = vld [vmem:[#allocation2 + $0x484] sm:$0xf]
    %v932 = vld [vmem:[#allocation2 + $0x488] sm:$0xf]
    %v933 = vld [vmem:[#allocation2 + $0x48c] sm:$0xf]
    %v934 = vld [vmem:[#allocation2 + $0x490] sm:$0xf]
    %v935 = vld [vmem:[#allocation2 + $0x494] sm:$0xf]
    %v936 = vld [vmem:[#allocation2 + $0x498] sm:$0xf]
    %v937 = vld [vmem:[#allocation2 + $0x49c] sm:$0xf]
    %v938 = vld [vmem:[#allocation2 + $0x4a0] sm:$0xf]
    %v939 = vld [vmem:[#allocation2 + $0x4a4] sm:$0xf]
    %v940 = vld [vmem:[#allocation2 + $0x4a8] sm:$0xf]
    %v941 = vld [vmem:[#allocation2 + $0x4ac] sm:$0xf]
    %v942 = vld [vmem:[#allocation2 + $0x4b0] sm:$0xf]
    %v943 = vld [vmem:[#allocation2 + $0x4b4] sm:$0xf]
    %v944 = vld [vmem:[#allocation2 + $0x4b8] sm:$0xf]
    %v945 = vld [vmem:[#allocation2 + $0x4bc] sm:$0xf]
    %v946 = vld [vmem:[#allocation2 + $0x4c0] sm:$0xf]
    %v947 = vld [vmem:[#allocation2 + $0x4c4] sm:$0xf]
    %v948 = vld [vmem:[#allocation2 + $0x4c8] sm:$0xf]
    %v949 = vld [vmem:[#allocation2 + $0x4cc] sm:$0xf]
    %v950 = vld [vmem:[#allocation2 + $0x4d0] sm:$0xf]
    %v951 = vld [vmem:[#allocation2 + $0x4d4] sm:$0xf]
    %v952 = vld [vmem:[#allocation2 + $0x4d8] sm:$0xf]
    %v953 = vld [vmem:[#allocation2 + $0x4dc] sm:$0xf]
    %v954 = vld [vmem:[#allocation2 + $0x4e0] sm:$0xf]
    %v955 = vld [vmem:[#allocation2 + $0x4e4] sm:$0xf]
    %v956 = vld [vmem:[#allocation2 + $0x4e8] sm:$0xf]
    %v957 = vld [vmem:[#allocation2 + $0x4ec] sm:$0xf]
    %v958 = vld [vmem:[#allocation2 + $0x4f0] sm:$0xf]
    %v959 = vld [vmem:[#allocation2 + $0x4f4] sm:$0xf]
    %v960 = vld [vmem:[#allocation2 + $0x4f8] sm:$0xf]
    %v961 = vld [vmem:[#allocation2 + $0x4fc] sm:$0xf]
    %v962 = vld [vmem:[#allocation2 + $0x500] sm:$0xf]
    %v963 = vld [vmem:[#allocation2 + $0x504] sm:$0xf]
    %v964 = vld [vmem:[#allocation2 + $0x508] sm:$0xf]
    %v965 = vld [vmem:[#allocation2 + $0x50c] sm:$0xf]
    %v966 = vld [vmem:[#allocation2 + $0x510] sm:$0xf]
    %v967 = vld [vmem:[#allocation2 + $0x514] sm:$0xf]
    %v968 = vld [vmem:[#allocation2 + $0x518] sm:$0xf]
    %v969 = vld [vmem:[#allocation2 + $0x51c] sm:$0xf]
    %v970 = vld [vmem:[#allocation2 + $0x520] sm:$0xf]
    %v971 = vld [vmem:[#allocation2 + $0x524] sm:$0xf]
    %v972 = vld [vmem:[#allocation2 + $0x528] sm:$0xf]
    %v973 = vld [vmem:[#allocation2 + $0x52c] sm:$0xf]
    %v974 = vld [vmem:[#allocation2 + $0x530] sm:$0xf]
    %v975 = vld [vmem:[#allocation2 + $0x534] sm:$0xf]
    %v976 = vld [vmem:[#allocation2 + $0x538] sm:$0xf]
    %v977 = vld [vmem:[#allocation2 + $0x53c] sm:$0xf]
    %v978 = vld [vmem:[#allocation2 + $0x540] sm:$0xf]
    %v979 = vld [vmem:[#allocation2 + $0x544] sm:$0xf]
    %v980 = vld [vmem:[#allocation2 + $0x548] sm:$0xf]
    %v981 = vld [vmem:[#allocation2 + $0x54c] sm:$0xf]
    %v982 = vld [vmem:[#allocation2 + $0x550] sm:$0xf]
    %v983 = vld [vmem:[#allocation2 + $0x554] sm:$0xf]
    %v984 = vld [vmem:[#allocation2 + $0x558] sm:$0xf]
    %v985 = vld [vmem:[#allocation2 + $0x55c] sm:$0xf]
    %v986 = vld [vmem:[#allocation2 + $0x560] sm:$0xf]
    %v987 = vld [vmem:[#allocation2 + $0x564] sm:$0xf]
    %v988 = vld [vmem:[#allocation2 + $0x568] sm:$0xf]
    %v989 = vld [vmem:[#allocation2 + $0x56c] sm:$0xf]
    %v990 = vld [vmem:[#allocation2 + $0x570] sm:$0xf]
    %v991 = vld [vmem:[#allocation2 + $0x574] sm:$0xf]
    %v992 = vld [vmem:[#allocation2 + $0x578] sm:$0xf]
    %v993 = vld [vmem:[#allocation2 + $0x57c] sm:$0xf]
    %v994 = vld [vmem:[#allocation2 + $0x580] sm:$0xf]
    %v995 = vld [vmem:[#allocation2 + $0x584] sm:$0xf]
    %v996 = vld [vmem:[#allocation2 + $0x588] sm:$0xf]
    %v997 = vld [vmem:[#allocation2 + $0x58c] sm:$0xf]
    %v998 = vld [vmem:[#allocation2 + $0x590] sm:$0xf]
    %v999 = vld [vmem:[#allocation2 + $0x594] sm:$0xf]
    %v1000 = vld [vmem:[#allocation2 + $0x598] sm:$0xf]
    %v1001 = vld [vmem:[#allocation2 + $0x59c] sm:$0xf]
    %v1002 = vld [vmem:[#allocation2 + $0x5a0] sm:$0xf]
    %v1003 = vld [vmem:[#allocation2 + $0x5a4] sm:$0xf]
    %v1004 = vld [vmem:[#allocation2 + $0x5a8] sm:$0xf]
    %v1005 = vld [vmem:[#allocation2 + $0x5ac] sm:$0xf]
    %v1006 = vld [vmem:[#allocation2 + $0x5b0] sm:$0xf]
    %v1007 = vld [vmem:[#allocation2 + $0x5b4] sm:$0xf]
    %v1008 = vld [vmem:[#allocation2 + $0x5b8] sm:$0xf]
    %v1009 = vld [vmem:[#allocation2 + $0x5bc] sm:$0xf]
    %v1010 = vld [vmem:[#allocation2 + $0x5c0] sm:$0xf]
    %v1011 = vld [vmem:[#allocation2 + $0x5c4] sm:$0xf]
    %v1012 = vld [vmem:[#allocation2 + $0x5c8] sm:$0xf]
    %v1013 = vld [vmem:[#allocation2 + $0x5cc] sm:$0xf]
    %v1014 = vld [vmem:[#allocation2 + $0x5d0] sm:$0xf]
    %v1015 = vld [vmem:[#allocation2 + $0x5d4] sm:$0xf]
    %v1016 = vld [vmem:[#allocation2 + $0x5d8] sm:$0xf]
    %v1017 = vld [vmem:[#allocation2 + $0x5dc] sm:$0xf]
    %v1018 = vld [vmem:[#allocation2 + $0x5e0] sm:$0xf]
    %v1019 = vld [vmem:[#allocation2 + $0x5e4] sm:$0xf]
    %v1020 = vld [vmem:[#allocation2 + $0x5e8] sm:$0xf]
    %v1021 = vld [vmem:[#allocation2 + $0x5ec] sm:$0xf]
    %v1022 = vld [vmem:[#allocation2 + $0x5f0] sm:$0xf]
    %v1023 = vld [vmem:[#allocation2 + $0x5f4] sm:$0xf]
    %v1024 = vld [vmem:[#allocation2 + $0x5f8] sm:$0xf]
    %v1025 = vld [vmem:[#allocation2 + $0x5fc] sm:$0xf]
    %v1026 = vld [vmem:[%s2] sm:$0x1]
    %v1028 = vlaneseq
    %v1029 = vshrl.u32 %v1028, 7
    %v1030 = vsub.s32 0, %v1029
    %v1031 = vrot.slane %v1026, %v1030
    %v1417 = vunpack.c.l.b16 %v642
    %v1418 = vunpack.c.l.b16 %v643
    %v1419 = vunpack.c.l.b16 %v644
    %v1420 = vunpack.c.l.b16 %v645
    %v1421 = vunpack.c.l.b16 %v646
    %v1422 = vunpack.c.l.b16 %v647
    %v1423 = vunpack.c.l.b16 %v648
    %v1424 = vunpack.c.l.b16 %v649
    %v1425 = vunpack.c.l.b16 %v650
    %v1426 = vunpack.c.l.b16 %v651
    %v1427 = vunpack.c.l.b16 %v652
    %v1428 = vunpack.c.l.b16 %v653
    %v1429 = vunpack.c.l.b16 %v654
    %v1430 = vunpack.c.l.b16 %v655
    %v1431 = vunpack.c.l.b16 %v656
    %v1432 = vunpack.c.l.b16 %v657
    %v1433 = vunpack.c.l.b16 %v658
    %v1434 = vunpack.c.l.b16 %v659
    %v1435 = vunpack.c.l.b16 %v660
    %v1436 = vunpack.c.l.b16 %v661
    %v1437 = vunpack.c.l.b16 %v662
    %v1438 = vunpack.c.l.b16 %v663
    %v1439 = vunpack.c.l.b16 %v664
    %v1440 = vunpack.c.l.b16 %v665
    %v1441 = vunpack.c.l.b16 %v666
    %v1442 = vunpack.c.l.b16 %v667
    %v1443 = vunpack.c.l.b16 %v668
    %v1444 = vunpack.c.l.b16 %v669
    %v1445 = vunpack.c.l.b16 %v670
    %v1446 = vunpack.c.l.b16 %v671
    %v1447 = vunpack.c.l.b16 %v672
    %v1448 = vunpack.c.l.b16 %v673
    %v1449 = vunpack.c.l.b16 %v674
    %v1450 = vunpack.c.l.b16 %v675
    %v1451 = vunpack.c.l.b16 %v676
    %v1452 = vunpack.c.l.b16 %v677
    %v1453 = vunpack.c.l.b16 %v678
    %v1454 = vunpack.c.l.b16 %v679
    %v1455 = vunpack.c.l.b16 %v680
    %v1456 = vunpack.c.l.b16 %v681
    %v1457 = vunpack.c.l.b16 %v682
    %v1458 = vunpack.c.l.b16 %v683
    %v1459 = vunpack.c.l.b16 %v684
    %v1460 = vunpack.c.l.b16 %v685
    %v1461 = vunpack.c.l.b16 %v686
    %v1462 = vunpack.c.l.b16 %v687
    %v1463 = vunpack.c.l.b16 %v688
    %v1464 = vunpack.c.l.b16 %v689
    %v1465 = vunpack.c.l.b16 %v690
    %v1466 = vunpack.c.l.b16 %v691
    %v1467 = vunpack.c.l.b16 %v692
    %v1468 = vunpack.c.l.b16 %v693
    %v1469 = vunpack.c.l.b16 %v694
    %v1470 = vunpack.c.l.b16 %v695
    %v1471 = vunpack.c.l.b16 %v696
    %v1472 = vunpack.c.l.b16 %v697
    %v1473 = vunpack.c.l.b16 %v698
    %v1474 = vunpack.c.l.b16 %v699
    %v1475 = vunpack.c.l.b16 %v700
    %v1476 = vunpack.c.l.b16 %v701
    %v1477 = vunpack.c.l.b16 %v702
    %v1478 = vunpack.c.l.b16 %v703
    %v1479 = vunpack.c.l.b16 %v704
    %v1480 = vunpack.c.l.b16 %v705
    %v1481 = vunpack.c.l.b16 %v706
    %v1482 = vunpack.c.l.b16 %v707
    %v1483 = vunpack.c.l.b16 %v708
    %v1484 = vunpack.c.l.b16 %v709
    %v1485 = vunpack.c.l.b16 %v710
    %v1486 = vunpack.c.l.b16 %v711
    %v1487 = vunpack.c.l.b16 %v712
    %v1488 = vunpack.c.l.b16 %v713
    %v1489 = vunpack.c.l.b16 %v714
    %v1490 = vunpack.c.l.b16 %v715
    %v1491 = vunpack.c.l.b16 %v716
    %v1492 = vunpack.c.l.b16 %v717
    %v1493 = vunpack.c.l.b16 %v718
    %v1494 = vunpack.c.l.b16 %v719
    %v1495 = vunpack.c.l.b16 %v720
    %v1496 = vunpack.c.l.b16 %v721
    %v1497 = vunpack.c.l.b16 %v722
    %v1498 = vunpack.c.l.b16 %v723
    %v1499 = vunpack.c.l.b16 %v724
    %v1500 = vunpack.c.l.b16 %v725
    %v1501 = vunpack.c.l.b16 %v726
    %v1502 = vunpack.c.l.b16 %v727
    %v1503 = vunpack.c.l.b16 %v728
    %v1504 = vunpack.c.l.b16 %v729
    %v1505 = vunpack.c.l.b16 %v730
    %v1506 = vunpack.c.l.b16 %v731
    %v1507 = vunpack.c.l.b16 %v732
    %v1508 = vunpack.c.l.b16 %v733
    %v1509 = vunpack.c.l.b16 %v734
    %v1510 = vunpack.c.l.b16 %v735
    %v1511 = vunpack.c.l.b16 %v736
    %v1512 = vunpack.c.l.b16 %v737
    %v1513 = vunpack.c.l.b16 %v738
    %v1514 = vunpack.c.l.b16 %v739
    %v1515 = vunpack.c.l.b16 %v740
    %v1516 = vunpack.c.l.b16 %v741
    %v1517 = vunpack.c.l.b16 %v742
    %v1518 = vunpack.c.l.b16 %v743
    %v1519 = vunpack.c.l.b16 %v744
    %v1520 = vunpack.c.l.b16 %v745
    %v1521 = vunpack.c.l.b16 %v746
    %v1522 = vunpack.c.l.b16 %v747
    %v1523 = vunpack.c.l.b16 %v748
    %v1524 = vunpack.c.l.b16 %v749
    %v1525 = vunpack.c.l.b16 %v750
    %v1526 = vunpack.c.l.b16 %v751
    %v1527 = vunpack.c.l.b16 %v752
    %v1528 = vunpack.c.l.b16 %v753
    %v1529 = vunpack.c.l.b16 %v754
    %v1530 = vunpack.c.l.b16 %v755
    %v1531 = vunpack.c.l.b16 %v756
    %v1532 = vunpack.c.l.b16 %v757
    %v1533 = vunpack.c.l.b16 %v758
    %v1534 = vunpack.c.l.b16 %v759
    %v1535 = vunpack.c.l.b16 %v760
    %v1536 = vunpack.c.l.b16 %v761
    %v1537 = vunpack.c.l.b16 %v762
    %v1538 = vunpack.c.l.b16 %v763
    %v1539 = vunpack.c.l.b16 %v764
    %v1540 = vunpack.c.l.b16 %v765
    %v1541 = vunpack.c.l.b16 %v766
    %v1542 = vunpack.c.l.b16 %v767
    %v1543 = vunpack.c.l.b16 %v768
    %v1544 = vunpack.c.l.b16 %v769
    %v1545 = vunpack.c.l.b16 %v770
    %v1546 = vunpack.c.l.b16 %v771
    %v1547 = vunpack.c.l.b16 %v772
    %v1548 = vunpack.c.l.b16 %v773
    %v1549 = vunpack.c.l.b16 %v774
    %v1550 = vunpack.c.l.b16 %v775
    %v1551 = vunpack.c.l.b16 %v776
    %v1552 = vunpack.c.l.b16 %v777
    %v1553 = vunpack.c.l.b16 %v778
    %v1554 = vunpack.c.l.b16 %v779
    %v1555 = vunpack.c.l.b16 %v780
    %v1556 = vunpack.c.l.b16 %v781
    %v1557 = vunpack.c.l.b16 %v782
    %v1558 = vunpack.c.l.b16 %v783
    %v1559 = vunpack.c.l.b16 %v784
    %v1560 = vunpack.c.l.b16 %v785
    %v1561 = vunpack.c.l.b16 %v786
    %v1562 = vunpack.c.l.b16 %v787
    %v1563 = vunpack.c.l.b16 %v788
    %v1564 = vunpack.c.l.b16 %v789
    %v1565 = vunpack.c.l.b16 %v790
    %v1566 = vunpack.c.l.b16 %v791
    %v1567 = vunpack.c.l.b16 %v792
    %v1568 = vunpack.c.l.b16 %v793
    %v1569 = vunpack.c.l.b16 %v794
    %v1570 = vunpack.c.l.b16 %v795
    %v1571 = vunpack.c.l.b16 %v796
    %v1572 = vunpack.c.l.b16 %v797
    %v1573 = vunpack.c.l.b16 %v798
    %v1574 = vunpack.c.l.b16 %v799
    %v1575 = vunpack.c.l.b16 %v800
    %v1576 = vunpack.c.l.b16 %v801
    %v1577 = vunpack.c.l.b16 %v802
    %v1578 = vunpack.c.l.b16 %v803
    %v1579 = vunpack.c.l.b16 %v804
    %v1580 = vunpack.c.l.b16 %v805
    %v1581 = vunpack.c.l.b16 %v806
    %v1582 = vunpack.c.l.b16 %v807
    %v1583 = vunpack.c.l.b16 %v808
    %v1584 = vunpack.c.l.b16 %v809
    %v1585 = vunpack.c.l.b16 %v810
    %v1586 = vunpack.c.l.b16 %v811
    %v1587 = vunpack.c.l.b16 %v812
    %v1588 = vunpack.c.l.b16 %v813
    %v1589 = vunpack.c.l.b16 %v814
    %v1590 = vunpack.c.l.b16 %v815
    %v1591 = vunpack.c.l.b16 %v816
    %v1592 = vunpack.c.l.b16 %v817
    %v1593 = vunpack.c.l.b16 %v818
    %v1594 = vunpack.c.l.b16 %v819
    %v1595 = vunpack.c.l.b16 %v820
    %v1596 = vunpack.c.l.b16 %v821
    %v1597 = vunpack.c.l.b16 %v822
    %v1598 = vunpack.c.l.b16 %v823
    %v1599 = vunpack.c.l.b16 %v824
    %v1600 = vunpack.c.l.b16 %v825
    %v1601 = vunpack.c.l.b16 %v826
    %v1602 = vunpack.c.l.b16 %v827
    %v1603 = vunpack.c.l.b16 %v828
    %v1604 = vunpack.c.l.b16 %v829
    %v1605 = vunpack.c.l.b16 %v830
    %v1606 = vunpack.c.l.b16 %v831
    %v1607 = vunpack.c.l.b16 %v832
    %v1608 = vunpack.c.l.b16 %v833
    %v1609 = vunpack.c.l.b16 %v834
    %v1610 = vunpack.c.l.b16 %v835
    %v1611 = vunpack.c.l.b16 %v836
    %v1612 = vunpack.c.l.b16 %v837
    %v1613 = vunpack.c.l.b16 %v838
    %v1614 = vunpack.c.l.b16 %v839
    %v1615 = vunpack.c.l.b16 %v840
    %v1616 = vunpack.c.l.b16 %v841
    %v1617 = vunpack.c.l.b16 %v842
    %v1618 = vunpack.c.l.b16 %v843
    %v1619 = vunpack.c.l.b16 %v844
    %v1620 = vunpack.c.l.b16 %v845
    %v1621 = vunpack.c.l.b16 %v846
    %v1622 = vunpack.c.l.b16 %v847
    %v1623 = vunpack.c.l.b16 %v848
    %v1624 = vunpack.c.l.b16 %v849
    %v1625 = vunpack.c.l.b16 %v850
    %v1626 = vunpack.c.l.b16 %v851
    %v1627 = vunpack.c.l.b16 %v852
    %v1628 = vunpack.c.l.b16 %v853
    %v1629 = vunpack.c.l.b16 %v854
    %v1630 = vunpack.c.l.b16 %v855
    %v1631 = vunpack.c.l.b16 %v856
    %v1632 = vunpack.c.l.b16 %v857
    %v1633 = vunpack.c.l.b16 %v858
    %v1634 = vunpack.c.l.b16 %v859
    %v1635 = vunpack.c.l.b16 %v860
    %v1636 = vunpack.c.l.b16 %v861
    %v1637 = vunpack.c.l.b16 %v862
    %v1638 = vunpack.c.l.b16 %v863
    %v1639 = vunpack.c.l.b16 %v864
    %v1640 = vunpack.c.l.b16 %v865
    %v1641 = vunpack.c.l.b16 %v866
    %v1642 = vunpack.c.l.b16 %v867
    %v1643 = vunpack.c.l.b16 %v868
    %v1644 = vunpack.c.l.b16 %v869
    %v1645 = vunpack.c.l.b16 %v870
    %v1646 = vunpack.c.l.b16 %v871
    %v1647 = vunpack.c.l.b16 %v872
    %v1648 = vunpack.c.l.b16 %v873
    %v1649 = vunpack.c.l.b16 %v874
    %v1650 = vunpack.c.l.b16 %v875
    %v1651 = vunpack.c.l.b16 %v876
    %v1652 = vunpack.c.l.b16 %v877
    %v1653 = vunpack.c.l.b16 %v878
    %v1654 = vunpack.c.l.b16 %v879
    %v1655 = vunpack.c.l.b16 %v880
    %v1656 = vunpack.c.l.b16 %v881
    %v1657 = vunpack.c.l.b16 %v882
    %v1658 = vunpack.c.l.b16 %v883
    %v1659 = vunpack.c.l.b16 %v884
    %v1660 = vunpack.c.l.b16 %v885
    %v1661 = vunpack.c.l.b16 %v886
    %v1662 = vunpack.c.l.b16 %v887
    %v1663 = vunpack.c.l.b16 %v888
    %v1664 = vunpack.c.l.b16 %v889
    %v1665 = vunpack.c.l.b16 %v890
    %v1666 = vunpack.c.l.b16 %v891
    %v1667 = vunpack.c.l.b16 %v892
    %v1668 = vunpack.c.l.b16 %v893
    %v1669 = vunpack.c.l.b16 %v894
    %v1670 = vunpack.c.l.b16 %v895
    %v1671 = vunpack.c.l.b16 %v896
    %v1672 = vunpack.c.l.b16 %v897
    %v1673 = vunpack.c.l.b16 %v898
    %v1674 = vunpack.c.l.b16 %v899
    %v1675 = vunpack.c.l.b16 %v900
    %v1676 = vunpack.c.l.b16 %v901
    %v1677 = vunpack.c.l.b16 %v902
    %v1678 = vunpack.c.l.b16 %v903
    %v1679 = vunpack.c.l.b16 %v904
    %v1680 = vunpack.c.l.b16 %v905
    %v1681 = vunpack.c.l.b16 %v906
    %v1682 = vunpack.c.l.b16 %v907
    %v1683 = vunpack.c.l.b16 %v908
    %v1684 = vunpack.c.l.b16 %v909
    %v1685 = vunpack.c.l.b16 %v910
    %v1686 = vunpack.c.l.b16 %v911
    %v1687 = vunpack.c.l.b16 %v912
    %v1688 = vunpack.c.l.b16 %v913
    %v1689 = vunpack.c.l.b16 %v914
    %v1690 = vunpack.c.l.b16 %v915
    %v1691 = vunpack.c.l.b16 %v916
    %v1692 = vunpack.c.l.b16 %v917
    %v1693 = vunpack.c.l.b16 %v918
    %v1694 = vunpack.c.l.b16 %v919
    %v1695 = vunpack.c.l.b16 %v920
    %v1696 = vunpack.c.l.b16 %v921
    %v1697 = vunpack.c.l.b16 %v922
    %v1698 = vunpack.c.l.b16 %v923
    %v1699 = vunpack.c.l.b16 %v924
    %v1700 = vunpack.c.l.b16 %v925
    %v1701 = vunpack.c.l.b16 %v926
    %v1702 = vunpack.c.l.b16 %v927
    %v1703 = vunpack.c.l.b16 %v928
    %v1704 = vunpack.c.l.b16 %v929
    %v1705 = vunpack.c.l.b16 %v930
    %v1706 = vunpack.c.l.b16 %v931
    %v1707 = vunpack.c.l.b16 %v932
    %v1708 = vunpack.c.l.b16 %v933
    %v1709 = vunpack.c.l.b16 %v934
    %v1710 = vunpack.c.l.b16 %v935
    %v1711 = vunpack.c.l.b16 %v936
    %v1712 = vunpack.c.l.b16 %v937
    %v1713 = vunpack.c.l.b16 %v938
    %v1714 = vunpack.c.l.b16 %v939
    %v1715 = vunpack.c.l.b16 %v940
    %v1716 = vunpack.c.l.b16 %v941
    %v1717 = vunpack.c.l.b16 %v942
    %v1718 = vunpack.c.l.b16 %v943
    %v1719 = vunpack.c.l.b16 %v944
    %v1720 = vunpack.c.l.b16 %v945
    %v1721 = vunpack.c.l.b16 %v946
    %v1722 = vunpack.c.l.b16 %v947
    %v1723 = vunpack.c.l.b16 %v948
    %v1724 = vunpack.c.l.b16 %v949
    %v1725 = vunpack.c.l.b16 %v950
    %v1726 = vunpack.c.l.b16 %v951
    %v1727 = vunpack.c.l.b16 %v952
    %v1728 = vunpack.c.l.b16 %v953
    %v1729 = vunpack.c.l.b16 %v954
    %v1730 = vunpack.c.l.b16 %v955
    %v1731 = vunpack.c.l.b16 %v956
    %v1732 = vunpack.c.l.b16 %v957
    %v1733 = vunpack.c.l.b16 %v958
    %v1734 = vunpack.c.l.b16 %v959
    %v1735 = vunpack.c.l.b16 %v960
    %v1736 = vunpack.c.l.b16 %v961
    %v1737 = vunpack.c.l.b16 %v962
    %v1738 = vunpack.c.l.b16 %v963
    %v1739 = vunpack.c.l.b16 %v964
    %v1740 = vunpack.c.l.b16 %v965
    %v1741 = vunpack.c.l.b16 %v966
    %v1742 = vunpack.c.l.b16 %v967
    %v1743 = vunpack.c.l.b16 %v968
    %v1744 = vunpack.c.l.b16 %v969
    %v1745 = vunpack.c.l.b16 %v970
    %v1746 = vunpack.c.l.b16 %v971
    %v1747 = vunpack.c.l.b16 %v972
    %v1748 = vunpack.c.l.b16 %v973
    %v1749 = vunpack.c.l.b16 %v974
    %v1750 = vunpack.c.l.b16 %v975
    %v1751 = vunpack.c.l.b16 %v976
    %v1752 = vunpack.c.l.b16 %v977
    %v1753 = vunpack.c.l.b16 %v978
    %v1754 = vunpack.c.l.b16 %v979
    %v1755 = vunpack.c.l.b16 %v980
    %v1756 = vunpack.c.l.b16 %v981
    %v1757 = vunpack.c.l.b16 %v982
    %v1758 = vunpack.c.l.b16 %v983
    %v1759 = vunpack.c.l.b16 %v984
    %v1760 = vunpack.c.l.b16 %v985
    %v1761 = vunpack.c.l.b16 %v986
    %v1762 = vunpack.c.l.b16 %v987
    %v1763 = vunpack.c.l.b16 %v988
    %v1764 = vunpack.c.l.b16 %v989
    %v1765 = vunpack.c.l.b16 %v990
    %v1766 = vunpack.c.l.b16 %v991
    %v1767 = vunpack.c.l.b16 %v992
    %v1768 = vunpack.c.l.b16 %v993
    %v1769 = vunpack.c.l.b16 %v994
    %v1770 = vunpack.c.l.b16 %v995
    %v1771 = vunpack.c.l.b16 %v996
    %v1772 = vunpack.c.l.b16 %v997
    %v1773 = vunpack.c.l.b16 %v998
    %v1774 = vunpack.c.l.b16 %v999
    %v1775 = vunpack.c.l.b16 %v1000
    %v1776 = vunpack.c.l.b16 %v1001
    %v1777 = vunpack.c.l.b16 %v1002
    %v1778 = vunpack.c.l.b16 %v1003
    %v1779 = vunpack.c.l.b16 %v1004
    %v1780 = vunpack.c.l.b16 %v1005
    %v1781 = vunpack.c.l.b16 %v1006
    %v1782 = vunpack.c.l.b16 %v1007
    %v1783 = vunpack.c.l.b16 %v1008
    %v1784 = vunpack.c.l.b16 %v1009
    %v1785 = vunpack.c.l.b16 %v1010
    %v1786 = vunpack.c.l.b16 %v1011
    %v1787 = vunpack.c.l.b16 %v1012
    %v1788 = vunpack.c.l.b16 %v1013
    %v1789 = vunpack.c.l.b16 %v1014
    %v1790 = vunpack.c.l.b16 %v1015
    %v1791 = vunpack.c.l.b16 %v1016
    %v1792 = vunpack.c.l.b16 %v1017
    %v1793 = vunpack.c.l.b16 %v1018
    %v1794 = vunpack.c.l.b16 %v1019
    %v1795 = vunpack.c.l.b16 %v1020
    %v1796 = vunpack.c.l.b16 %v1021
    %v1797 = vunpack.c.l.b16 %v1022
    %v1798 = vunpack.c.l.b16 %v1023
    %v1799 = vunpack.c.l.b16 %v1024
    %v1800 = vunpack.c.l.b16 %v1025
    %v1801 = vpack.c.b16 %v1418, %v1417
    %v1802 = vpack.c.b16 %v1420, %v1419
    %v1803 = vpack.c.b16 %v1422, %v1421
    %v1804 = vpack.c.b16 %v1424, %v1423
    %v1805 = vpack.c.b16 %v1426, %v1425
    %v1806 = vpack.c.b16 %v1428, %v1427
    %v1807 = vpack.c.b16 %v1430, %v1429
    %v1808 = vpack.c.b16 %v1432, %v1431
    %v1809 = vpack.c.b16 %v1434, %v1433
    %v1810 = vpack.c.b16 %v1436, %v1435
    %v1811 = vpack.c.b16 %v1438, %v1437
    %v1812 = vpack.c.b16 %v1440, %v1439
    %v1813 = vpack.c.b16 %v1442, %v1441
    %v1814 = vpack.c.b16 %v1444, %v1443
    %v1815 = vpack.c.b16 %v1446, %v1445
    %v1816 = vpack.c.b16 %v1448, %v1447
    %v1817 = vpack.c.b16 %v1450, %v1449
    %v1818 = vpack.c.b16 %v1452, %v1451
    %v1819 = vpack.c.b16 %v1454, %v1453
    %v1820 = vpack.c.b16 %v1456, %v1455
    %v1821 = vpack.c.b16 %v1458, %v1457
    %v1822 = vpack.c.b16 %v1460, %v1459
    %v1823 = vpack.c.b16 %v1462, %v1461
    %v1824 = vpack.c.b16 %v1464, %v1463
    %v1825 = vpack.c.b16 %v1466, %v1465
    %v1826 = vpack.c.b16 %v1468, %v1467
    %v1827 = vpack.c.b16 %v1470, %v1469
    %v1828 = vpack.c.b16 %v1472, %v1471
    %v1829 = vpack.c.b16 %v1474, %v1473
    %v1830 = vpack.c.b16 %v1476, %v1475
    %v1831 = vpack.c.b16 %v1478, %v1477
    %v1832 = vpack.c.b16 %v1480, %v1479
    %v1833 = vpack.c.b16 %v1482, %v1481
    %v1834 = vpack.c.b16 %v1484, %v1483
    %v1835 = vpack.c.b16 %v1486, %v1485
    %v1836 = vpack.c.b16 %v1488, %v1487
    %v1837 = vpack.c.b16 %v1490, %v1489
    %v1838 = vpack.c.b16 %v1492, %v1491
    %v1839 = vpack.c.b16 %v1494, %v1493
    %v1840 = vpack.c.b16 %v1496, %v1495
    %v1841 = vpack.c.b16 %v1498, %v1497
    %v1842 = vpack.c.b16 %v1500, %v1499
    %v1843 = vpack.c.b16 %v1502, %v1501
    %v1844 = vpack.c.b16 %v1504, %v1503
    %v1845 = vpack.c.b16 %v1506, %v1505
    %v1846 = vpack.c.b16 %v1508, %v1507
    %v1847 = vpack.c.b16 %v1510, %v1509
    %v1848 = vpack.c.b16 %v1512, %v1511
    %v1849 = vpack.c.b16 %v1514, %v1513
    %v1850 = vpack.c.b16 %v1516, %v1515
    %v1851 = vpack.c.b16 %v1518, %v1517
    %v1852 = vpack.c.b16 %v1520, %v1519
    %v1853 = vpack.c.b16 %v1522, %v1521
    %v1854 = vpack.c.b16 %v1524, %v1523
    %v1855 = vpack.c.b16 %v1526, %v1525
    %v1856 = vpack.c.b16 %v1528, %v1527
    %v1857 = vpack.c.b16 %v1530, %v1529
    %v1858 = vpack.c.b16 %v1532, %v1531
    %v1859 = vpack.c.b16 %v1534, %v1533
    %v1860 = vpack.c.b16 %v1536, %v1535
    %v1861 = vpack.c.b16 %v1538, %v1537
    %v1862 = vpack.c.b16 %v1540, %v1539
    %v1863 = vpack.c.b16 %v1542, %v1541
    %v1864 = vpack.c.b16 %v1544, %v1543
    %v1865 = vpack.c.b16 %v1546, %v1545
    %v1866 = vpack.c.b16 %v1548, %v1547
    %v1867 = vpack.c.b16 %v1550, %v1549
    %v1868 = vpack.c.b16 %v1552, %v1551
    %v1869 = vpack.c.b16 %v1554, %v1553
    %v1870 = vpack.c.b16 %v1556, %v1555
    %v1871 = vpack.c.b16 %v1558, %v1557
    %v1872 = vpack.c.b16 %v1560, %v1559
    %v1873 = vpack.c.b16 %v1562, %v1561
    %v1874 = vpack.c.b16 %v1564, %v1563
    %v1875 = vpack.c.b16 %v1566, %v1565
    %v1876 = vpack.c.b16 %v1568, %v1567
    %v1877 = vpack.c.b16 %v1570, %v1569
    %v1878 = vpack.c.b16 %v1572, %v1571
    %v1879 = vpack.c.b16 %v1574, %v1573
    %v1880 = vpack.c.b16 %v1576, %v1575
    %v1881 = vpack.c.b16 %v1578, %v1577
    %v1882 = vpack.c.b16 %v1580, %v1579
    %v1883 = vpack.c.b16 %v1582, %v1581
    %v1884 = vpack.c.b16 %v1584, %v1583
    %v1885 = vpack.c.b16 %v1586, %v1585
    %v1886 = vpack.c.b16 %v1588, %v1587
    %v1887 = vpack.c.b16 %v1590, %v1589
    %v1888 = vpack.c.b16 %v1592, %v1591
    %v1889 = vpack.c.b16 %v1594, %v1593
    %v1890 = vpack.c.b16 %v1596, %v1595
    %v1891 = vpack.c.b16 %v1598, %v1597
    %v1892 = vpack.c.b16 %v1600, %v1599
    %v1893 = vpack.c.b16 %v1602, %v1601
    %v1894 = vpack.c.b16 %v1604, %v1603
    %v1895 = vpack.c.b16 %v1606, %v1605
    %v1896 = vpack.c.b16 %v1608, %v1607
    %v1897 = vpack.c.b16 %v1610, %v1609
    %v1898 = vpack.c.b16 %v1612, %v1611
    %v1899 = vpack.c.b16 %v1614, %v1613
    %v1900 = vpack.c.b16 %v1616, %v1615
    %v1901 = vpack.c.b16 %v1618, %v1617
    %v1902 = vpack.c.b16 %v1620, %v1619
    %v1903 = vpack.c.b16 %v1622, %v1621
    %v1904 = vpack.c.b16 %v1624, %v1623
    %v1905 = vpack.c.b16 %v1626, %v1625
    %v1906 = vpack.c.b16 %v1628, %v1627
    %v1907 = vpack.c.b16 %v1630, %v1629
    %v1908 = vpack.c.b16 %v1632, %v1631
    %v1909 = vpack.c.b16 %v1634, %v1633
    %v1910 = vpack.c.b16 %v1636, %v1635
    %v1911 = vpack.c.b16 %v1638, %v1637
    %v1912 = vpack.c.b16 %v1640, %v1639
    %v1913 = vpack.c.b16 %v1642, %v1641
    %v1914 = vpack.c.b16 %v1644, %v1643
    %v1915 = vpack.c.b16 %v1646, %v1645
    %v1916 = vpack.c.b16 %v1648, %v1647
    %v1917 = vpack.c.b16 %v1650, %v1649
    %v1918 = vpack.c.b16 %v1652, %v1651
    %v1919 = vpack.c.b16 %v1654, %v1653
    %v1920 = vpack.c.b16 %v1656, %v1655
    %v1921 = vpack.c.b16 %v1658, %v1657
    %v1922 = vpack.c.b16 %v1660, %v1659
    %v1923 = vpack.c.b16 %v1662, %v1661
    %v1924 = vpack.c.b16 %v1664, %v1663
    %v1925 = vpack.c.b16 %v1666, %v1665
    %v1926 = vpack.c.b16 %v1668, %v1667
    %v1927 = vpack.c.b16 %v1670, %v1669
    %v1928 = vpack.c.b16 %v1672, %v1671
    %v1929 = vpack.c.b16 %v1674, %v1673
    %v1930 = vpack.c.b16 %v1676, %v1675
    %v1931 = vpack.c.b16 %v1678, %v1677
    %v1932 = vpack.c.b16 %v1680, %v1679
    %v1933 = vpack.c.b16 %v1682, %v1681
    %v1934 = vpack.c.b16 %v1684, %v1683
    %v1935 = vpack.c.b16 %v1686, %v1685
    %v1936 = vpack.c.b16 %v1688, %v1687
    %v1937 = vpack.c.b16 %v1690, %v1689
    %v1938 = vpack.c.b16 %v1692, %v1691
    %v1939 = vpack.c.b16 %v1694, %v1693
    %v1940 = vpack.c.b16 %v1696, %v1695
    %v1941 = vpack.c.b16 %v1698, %v1697
    %v1942 = vpack.c.b16 %v1700, %v1699
    %v1943 = vpack.c.b16 %v1702, %v1701
    %v1944 = vpack.c.b16 %v1704, %v1703
    %v1945 = vpack.c.b16 %v1706, %v1705
    %v1946 = vpack.c.b16 %v1708, %v1707
    %v1947 = vpack.c.b16 %v1710, %v1709
    %v1948 = vpack.c.b16 %v1712, %v1711
    %v1949 = vpack.c.b16 %v1714, %v1713
    %v1950 = vpack.c.b16 %v1716, %v1715
    %v1951 = vpack.c.b16 %v1718, %v1717
    %v1952 = vpack.c.b16 %v1720, %v1719
    %v1953 = vpack.c.b16 %v1722, %v1721
    %v1954 = vpack.c.b16 %v1724, %v1723
    %v1955 = vpack.c.b16 %v1726, %v1725
    %v1956 = vpack.c.b16 %v1728, %v1727
    %v1957 = vpack.c.b16 %v1730, %v1729
    %v1958 = vpack.c.b16 %v1732, %v1731
    %v1959 = vpack.c.b16 %v1734, %v1733
    %v1960 = vpack.c.b16 %v1736, %v1735
    %v1961 = vpack.c.b16 %v1738, %v1737
    %v1962 = vpack.c.b16 %v1740, %v1739
    %v1963 = vpack.c.b16 %v1742, %v1741
    %v1964 = vpack.c.b16 %v1744, %v1743
    %v1965 = vpack.c.b16 %v1746, %v1745
    %v1966 = vpack.c.b16 %v1748, %v1747
    %v1967 = vpack.c.b16 %v1750, %v1749
    %v1968 = vpack.c.b16 %v1752, %v1751
    %v1969 = vpack.c.b16 %v1754, %v1753
    %v1970 = vpack.c.b16 %v1756, %v1755
    %v1971 = vpack.c.b16 %v1758, %v1757
    %v1972 = vpack.c.b16 %v1760, %v1759
    %v1973 = vpack.c.b16 %v1762, %v1761
    %v1974 = vpack.c.b16 %v1764, %v1763
    %v1975 = vpack.c.b16 %v1766, %v1765
    %v1976 = vpack.c.b16 %v1768, %v1767
    %v1977 = vpack.c.b16 %v1770, %v1769
    %v1978 = vpack.c.b16 %v1772, %v1771
    %v1979 = vpack.c.b16 %v1774, %v1773
    %v1980 = vpack.c.b16 %v1776, %v1775
    %v1981 = vpack.c.b16 %v1778, %v1777
    %v1982 = vpack.c.b16 %v1780, %v1779
    %v1983 = vpack.c.b16 %v1782, %v1781
    %v1984 = vpack.c.b16 %v1784, %v1783
    %v1985 = vpack.c.b16 %v1786, %v1785
    %v1986 = vpack.c.b16 %v1788, %v1787
    %v1987 = vpack.c.b16 %v1790, %v1789
    %v1988 = vpack.c.b16 %v1792, %v1791
    %v1989 = vpack.c.b16 %v1794, %v1793
    %v1990 = vpack.c.b16 %v1796, %v1795
    %v1991 = vpack.c.b16 %v1798, %v1797
    %v1992 = vpack.c.b16 %v1800, %v1799
    %2185 = vmatprep.subr.bf16.mxu0 0
    %2186 = vmatpush1.bf16.msra.mxu0 %v1801
    %2187 = vmatprep.subr.bf16.mxu0 0
    %2188 = vmatpush1.bf16.msra.mxu0 %v1802
    %2189 = vmatprep.subr.bf16.mxu0 0
    %2190 = vmatpush1.bf16.msra.mxu0 %v1803
    %2191 = vmatprep.subr.bf16.mxu0 0
    %2192 = vmatpush1.bf16.msra.mxu0 %v1804
    %2193 = vmatprep.subr.bf16.mxu0 0
    %2194 = vmatpush1.bf16.msra.mxu0 %v1805
    %2195 = vmatprep.subr.bf16.mxu0 0
    %2196 = vmatpush1.bf16.msra.mxu0 %v1806
    %2197 = vmatprep.subr.bf16.mxu0 0
    %2198 = vmatpush1.bf16.msra.mxu0 %v1807
    %2199 = vmatprep.subr.bf16.mxu0 0
    %2200 = vmatpush1.bf16.msra.mxu0 %v1808
    %2201 = vmatprep.subr.bf16.mxu0 0
    %2202 = vmatpush1.bf16.msra.mxu0 %v1809
    %2203 = vmatprep.subr.bf16.mxu0 0
    %2204 = vmatpush1.bf16.msra.mxu0 %v1810
    %2205 = vmatprep.subr.bf16.mxu0 0
    %2206 = vmatpush1.bf16.msra.mxu0 %v1811
    %2207 = vmatprep.subr.bf16.mxu0 0
    %2208 = vmatpush1.bf16.msra.mxu0 %v1812
    %2209 = vmatprep.subr.bf16.mxu0 0
    %2210 = vmatpush1.bf16.msra.mxu0 %v1813
    %2211 = vmatprep.subr.bf16.mxu0 0
    %2212 = vmatpush1.bf16.msra.mxu0 %v1814
    %2213 = vmatprep.subr.bf16.mxu0 0
    %2214 = vmatpush1.bf16.msra.mxu0 %v1815
    %2215 = vmatprep.subr.bf16.mxu0 0
    %2216 = vmatpush1.bf16.msra.mxu0 %v1816
    %2217 = vmatprep.mubr.bf16.mxu0 %v619
    %2218 = vmatmul.mubr.bf16.gmra.mrb[0].mxu0 %v618
    %v2219 = vpop.f32.mrb[0].mxu0
    %v2220 = vadd.f32 %v1031, %v2219
    %v2221 = vpop.f32.mrb[0].mxu0
    %v2222 = vpop.f32.mrb[0].mxu0
    %v2223 = vadd.f32 %v1031, %v2222
    %v2224 = vpop.f32.mrb[0].mxu0
    %2225 = vdwg.mxu0
    %2226 = vmatprep.subr.bf16.mxu0 0
    %2227 = vmatpush1.bf16.msra.mxu0 %v1817
    %2228 = vmatprep.subr.bf16.mxu0 0
    %2229 = vmatpush1.bf16.msra.mxu0 %v1818
    %2230 = vmatprep.subr.bf16.mxu0 0
    %2231 = vmatpush1.bf16.msra.mxu0 %v1819
    %2232 = vmatprep.subr.bf16.mxu0 0
    %2233 = vmatpush1.bf16.msra.mxu0 %v1820
    %2234 = vmatprep.subr.bf16.mxu0 0
    %2235 = vmatpush1.bf16.msra.mxu0 %v1821
    %2236 = vmatprep.subr.bf16.mxu0 0
    %2237 = vmatpush1.bf16.msra.mxu0 %v1822
    %2238 = vmatprep.subr.bf16.mxu0 0
    %2239 = vmatpush1.bf16.msra.mxu0 %v1823
    %2240 = vmatprep.subr.bf16.mxu0 0
    %2241 = vmatpush1.bf16.msra.mxu0 %v1824
    %2242 = vmatprep.subr.bf16.mxu0 0
    %2243 = vmatpush1.bf16.msra.mxu0 %v1825
    %2244 = vmatprep.subr.bf16.mxu0 0
    %2245 = vmatpush1.bf16.msra.mxu0 %v1826
    %2246 = vmatprep.subr.bf16.mxu0 0
    %2247 = vmatpush1.bf16.msra.mxu0 %v1827
    %2248 = vmatprep.subr.bf16.mxu0 0
    %2249 = vmatpush1.bf16.msra.mxu0 %v1828
    %2250 = vmatprep.subr.bf16.mxu0 0
    %2251 = vmatpush1.bf16.msra.mxu0 %v1829
    %2252 = vmatprep.subr.bf16.mxu0 0
    %2253 = vmatpush1.bf16.msra.mxu0 %v1830
    %2254 = vmatprep.subr.bf16.mxu0 0
    %2255 = vmatpush1.bf16.msra.mxu0 %v1831
    %2256 = vmatprep.subr.bf16.mxu0 0
    %2257 = vmatpush1.bf16.msra.mxu0 %v1832
    %2258 = vmatprep.mubr.bf16.mxu0 %v621
    %2259 = vmatmul.mubr.bf16.gmra.mrb[0].mxu0 %v620
    %v2260 = vpop.f32.mrb[0].mxu0
    %v2261 = vadd.f32 %v2220, %v2260
    %v2262 = vpop.f32.mrb[0].mxu0
    %v2263 = vpop.f32.mrb[0].mxu0
    %v2264 = vadd.f32 %v2223, %v2263
    %v2265 = vpop.f32.mrb[0].mxu0
    %2266 = vdwg.mxu0
    %2267 = vmatprep.subr.bf16.mxu0 0
    %2268 = vmatpush1.bf16.msra.mxu0 %v1833
    %2269 = vmatprep.subr.bf16.mxu0 0
    %2270 = vmatpush1.bf16.msra.mxu0 %v1834
    %2271 = vmatprep.subr.bf16.mxu0 0
    %2272 = vmatpush1.bf16.msra.mxu0 %v1835
    %2273 = vmatprep.subr.bf16.mxu0 0
    %2274 = vmatpush1.bf16.msra.mxu0 %v1836
    %2275 = vmatprep.subr.bf16.mxu0 0
    %2276 = vmatpush1.bf16.msra.mxu0 %v1837
    %2277 = vmatprep.subr.bf16.mxu0 0
    %2278 = vmatpush1.bf16.msra.mxu0 %v1838
    %2279 = vmatprep.subr.bf16.mxu0 0
    %2280 = vmatpush1.bf16.msra.mxu0 %v1839
    %2281 = vmatprep.subr.bf16.mxu0 0
    %2282 = vmatpush1.bf16.msra.mxu0 %v1840
    %2283 = vmatprep.subr.bf16.mxu0 0
    %2284 = vmatpush1.bf16.msra.mxu0 %v1841
    %2285 = vmatprep.subr.bf16.mxu0 0
    %2286 = vmatpush1.bf16.msra.mxu0 %v1842
    %2287 = vmatprep.subr.bf16.mxu0 0
    %2288 = vmatpush1.bf16.msra.mxu0 %v1843
    %2289 = vmatprep.subr.bf16.mxu0 0
    %2290 = vmatpush1.bf16.msra.mxu0 %v1844
    %2291 = vmatprep.subr.bf16.mxu0 0
    %2292 = vmatpush1.bf16.msra.mxu0 %v1845
    %2293 = vmatprep.subr.bf16.mxu0 0
    %2294 = vmatpush1.bf16.msra.mxu0 %v1846
    %2295 = vmatprep.subr.bf16.mxu0 0
    %2296 = vmatpush1.bf16.msra.mxu0 %v1847
    %2297 = vmatprep.subr.bf16.mxu0 0
    %2298 = vmatpush1.bf16.msra.mxu0 %v1848
    %2299 = vmatprep.mubr.bf16.mxu0 %v623
    %2300 = vmatmul.mubr.bf16.gmra.mrb[0].mxu0 %v622
    %v2301 = vpop.f32.mrb[0].mxu0
    %v2302 = vadd.f32 %v2261, %v2301
    %v2303 = vpop.f32.mrb[0].mxu0
    %v2304 = vpop.f32.mrb[0].mxu0
    %v2305 = vadd.f32 %v2264, %v2304
    %v2306 = vpop.f32.mrb[0].mxu0
    %2307 = vdwg.mxu0
    %2308 = vmatprep.subr.bf16.mxu0 0
    %2309 = vmatpush1.bf16.msra.mxu0 %v1849
    %2310 = vmatprep.subr.bf16.mxu0 0
    %2311 = vmatpush1.bf16.msra.mxu0 %v1850
    %2312 = vmatprep.subr.bf16.mxu0 0
    %2313 = vmatpush1.bf16.msra.mxu0 %v1851
    %2314 = vmatprep.subr.bf16.mxu0 0
    %2315 = vmatpush1.bf16.msra.mxu0 %v1852
    %2316 = vmatprep.subr.bf16.mxu0 0
    %2317 = vmatpush1.bf16.msra.mxu0 %v1853
    %2318 = vmatprep.subr.bf16.mxu0 0
    %2319 = vmatpush1.bf16.msra.mxu0 %v1854
    %2320 = vmatprep.subr.bf16.mxu0 0
    %2321 = vmatpush1.bf16.msra.mxu0 %v1855
    %2322 = vmatprep.subr.bf16.mxu0 0
    %2323 = vmatpush1.bf16.msra.mxu0 %v1856
    %2324 = vmatprep.subr.bf16.mxu0 0
    %2325 = vmatpush1.bf16.msra.mxu0 %v1857
    %2326 = vmatprep.subr.bf16.mxu0 0
    %2327 = vmatpush1.bf16.msra.mxu0 %v1858
    %2328 = vmatprep.subr.bf16.mxu0 0
    %2329 = vmatpush1.bf16.msra.mxu0 %v1859
    %2330 = vmatprep.subr.bf16.mxu0 0
    %2331 = vmatpush1.bf16.msra.mxu0 %v1860
    %2332 = vmatprep.subr.bf16.mxu0 0
    %2333 = vmatpush1.bf16.msra.mxu0 %v1861
    %2334 = vmatprep.subr.bf16.mxu0 0
    %2335 = vmatpush1.bf16.msra.mxu0 %v1862
    %2336 = vmatprep.subr.bf16.mxu0 0
    %2337 = vmatpush1.bf16.msra.mxu0 %v1863
    %2338 = vmatprep.subr.bf16.mxu0 0
    %2339 = vmatpush1.bf16.msra.mxu0 %v1864
    %2340 = vmatprep.mubr.bf16.mxu0 %v625
    %2341 = vmatmul.mubr.bf16.gmra.mrb[0].mxu0 %v624
    %v2342 = vpop.f32.mrb[0].mxu0
    %v2343 = vadd.f32 %v2302, %v2342
    %v2344 = vpop.f32.mrb[0].mxu0
    %v2345 = vpop.f32.mrb[0].mxu0
    %v2346 = vadd.f32 %v2305, %v2345
    %v2347 = vpop.f32.mrb[0].mxu0
    %2348 = vdwg.mxu0
    %2349 = vmatprep.subr.bf16.mxu0 0
    %2350 = vmatpush1.bf16.msra.mxu0 %v1865
    %2351 = vmatprep.subr.bf16.mxu0 0
    %2352 = vmatpush1.bf16.msra.mxu0 %v1866
    %2353 = vmatprep.subr.bf16.mxu0 0
    %2354 = vmatpush1.bf16.msra.mxu0 %v1867
    %2355 = vmatprep.subr.bf16.mxu0 0
    %2356 = vmatpush1.bf16.msra.mxu0 %v1868
    %2357 = vmatprep.subr.bf16.mxu0 0
    %2358 = vmatpush1.bf16.msra.mxu0 %v1869
    %2359 = vmatprep.subr.bf16.mxu0 0
    %2360 = vmatpush1.bf16.msra.mxu0 %v1870
    %2361 = vmatprep.subr.bf16.mxu0 0
    %2362 = vmatpush1.bf16.msra.mxu0 %v1871
    %2363 = vmatprep.subr.bf16.mxu0 0
    %2364 = vmatpush1.bf16.msra.mxu0 %v1872
    %2365 = vmatprep.subr.bf16.mxu0 0
    %2366 = vmatpush1.bf16.msra.mxu0 %v1873
    %2367 = vmatprep.subr.bf16.mxu0 0
    %2368 = vmatpush1.bf16.msra.mxu0 %v1874
    %2369 = vmatprep.subr.bf16.mxu0 0
    %2370 = vmatpush1.bf16.msra.mxu0 %v1875
    %2371 = vmatprep.subr.bf16.mxu0 0
    %2372 = vmatpush1.bf16.msra.mxu0 %v1876
    %2373 = vmatprep.subr.bf16.mxu0 0
    %2374 = vmatpush1.bf16.msra.mxu0 %v1877
    %2375 = vmatprep.subr.bf16.mxu0 0
    %2376 = vmatpush1.bf16.msra.mxu0 %v1878
    %2377 = vmatprep.subr.bf16.mxu0 0
    %2378 = vmatpush1.bf16.msra.mxu0 %v1879
    %2379 = vmatprep.subr.bf16.mxu0 0
    %2380 = vmatpush1.bf16.msra.mxu0 %v1880
    %2381 = vmatprep.mubr.bf16.mxu0 %v627
    %2382 = vmatmul.mubr.bf16.gmra.mrb[0].mxu0 %v626
    %v2383 = vpop.f32.mrb[0].mxu0
    %v2384 = vadd.f32 %v2343, %v2383
    %v2385 = vpop.f32.mrb[0].mxu0
    %v2386 = vpop.f32.mrb[0].mxu0
    %v2387 = vadd.f32 %v2346, %v2386
    %v2388 = vpop.f32.mrb[0].mxu0
    %2389 = vdwg.mxu0
    %2390 = vmatprep.subr.bf16.mxu0 0
    %2391 = vmatpush1.bf16.msra.mxu0 %v1881
    %2392 = vmatprep.subr.bf16.mxu0 0
    %2393 = vmatpush1.bf16.msra.mxu0 %v1882
    %2394 = vmatprep.subr.bf16.mxu0 0
    %2395 = vmatpush1.bf16.msra.mxu0 %v1883
    %2396 = vmatprep.subr.bf16.mxu0 0
    %2397 = vmatpush1.bf16.msra.mxu0 %v1884
    %2398 = vmatprep.subr.bf16.mxu0 0
    %2399 = vmatpush1.bf16.msra.mxu0 %v1885
    %2400 = vmatprep.subr.bf16.mxu0 0
    %2401 = vmatpush1.bf16.msra.mxu0 %v1886
    %2402 = vmatprep.subr.bf16.mxu0 0
    %2403 = vmatpush1.bf16.msra.mxu0 %v1887
    %2404 = vmatprep.subr.bf16.mxu0 0
    %2405 = vmatpush1.bf16.msra.mxu0 %v1888
    %2406 = vmatprep.subr.bf16.mxu0 0
    %2407 = vmatpush1.bf16.msra.mxu0 %v1889
    %2408 = vmatprep.subr.bf16.mxu0 0
    %2409 = vmatpush1.bf16.msra.mxu0 %v1890
    %2410 = vmatprep.subr.bf16.mxu0 0
    %2411 = vmatpush1.bf16.msra.mxu0 %v1891
    %2412 = vmatprep.subr.bf16.mxu0 0
    %2413 = vmatpush1.bf16.msra.mxu0 %v1892
    %2414 = vmatprep.subr.bf16.mxu0 0
    %2415 = vmatpush1.bf16.msra.mxu0 %v1893
    %2416 = vmatprep.subr.bf16.mxu0 0
    %2417 = vmatpush1.bf16.msra.mxu0 %v1894
    %2418 = vmatprep.subr.bf16.mxu0 0
    %2419 = vmatpush1.bf16.msra.mxu0 %v1895
    %2420 = vmatprep.subr.bf16.mxu0 0
    %2421 = vmatpush1.bf16.msra.mxu0 %v1896
    %2422 = vmatprep.mubr.bf16.mxu0 %v629
    %2423 = vmatmul.mubr.bf16.gmra.mrb[0].mxu0 %v628
    %v2424 = vpop.f32.mrb[0].mxu0
    %v2425 = vadd.f32 %v2384, %v2424
    %v2426 = vpop.f32.mrb[0].mxu0
    %v2427 = vpop.f32.mrb[0].mxu0
    %v2428 = vadd.f32 %v2387, %v2427
    %v2429 = vpop.f32.mrb[0].mxu0
    %2430 = vdwg.mxu0
    %2431 = vmatprep.subr.bf16.mxu0 0
    %2432 = vmatpush1.bf16.msra.mxu0 %v1897
    %2433 = vmatprep.subr.bf16.mxu0 0
    %2434 = vmatpush1.bf16.msra.mxu0 %v1898
    %2435 = vmatprep.subr.bf16.mxu0 0
    %2436 = vmatpush1.bf16.msra.mxu0 %v1899
    %2437 = vmatprep.subr.bf16.mxu0 0
    %2438 = vmatpush1.bf16.msra.mxu0 %v1900
    %2439 = vmatprep.subr.bf16.mxu0 0
    %2440 = vmatpush1.bf16.msra.mxu0 %v1901
    %2441 = vmatprep.subr.bf16.mxu0 0
    %2442 = vmatpush1.bf16.msra.mxu0 %v1902
    %2443 = vmatprep.subr.bf16.mxu0 0
    %2444 = vmatpush1.bf16.msra.mxu0 %v1903
    %2445 = vmatprep.subr.bf16.mxu0 0
    %2446 = vmatpush1.bf16.msra.mxu0 %v1904
    %2447 = vmatprep.subr.bf16.mxu0 0
    %2448 = vmatpush1.bf16.msra.mxu0 %v1905
    %2449 = vmatprep.subr.bf16.mxu0 0
    %2450 = vmatpush1.bf16.msra.mxu0 %v1906
    %2451 = vmatprep.subr.bf16.mxu0 0
    %2452 = vmatpush1.bf16.msra.mxu0 %v1907
    %2453 = vmatprep.subr.bf16.mxu0 0
    %2454 = vmatpush1.bf16.msra.mxu0 %v1908
    %2455 = vmatprep.subr.bf16.mxu0 0
    %2456 = vmatpush1.bf16.msra.mxu0 %v1909
    %2457 = vmatprep.subr.bf16.mxu0 0
    %2458 = vmatpush1.bf16.msra.mxu0 %v1910
    %2459 = vmatprep.subr.bf16.mxu0 0
    %2460 = vmatpush1.bf16.msra.mxu0 %v1911
    %2461 = vmatprep.subr.bf16.mxu0 0
    %2462 = vmatpush1.bf16.msra.mxu0 %v1912
    %2463 = vmatprep.mubr.bf16.mxu0 %v631
    %2464 = vmatmul.mubr.bf16.gmra.mrb[0].mxu0 %v630
    %v2465 = vpop.f32.mrb[0].mxu0
    %v2466 = vadd.f32 %v2425, %v2465
    %v2467 = vpop.f32.mrb[0].mxu0
    %v2468 = vpop.f32.mrb[0].mxu0
    %v2469 = vadd.f32 %v2428, %v2468
    %v2470 = vpop.f32.mrb[0].mxu0
    %2471 = vdwg.mxu0
    %2472 = vmatprep.subr.bf16.mxu0 0
    %2473 = vmatpush1.bf16.msra.mxu0 %v1913
    %2474 = vmatprep.subr.bf16.mxu0 0
    %2475 = vmatpush1.bf16.msra.mxu0 %v1914
    %2476 = vmatprep.subr.bf16.mxu0 0
    %2477 = vmatpush1.bf16.msra.mxu0 %v1915
    %2478 = vmatprep.subr.bf16.mxu0 0
    %2479 = vmatpush1.bf16.msra.mxu0 %v1916
    %2480 = vmatprep.subr.bf16.mxu0 0
    %2481 = vmatpush1.bf16.msra.mxu0 %v1917
    %2482 = vmatprep.subr.bf16.mxu0 0
    %2483 = vmatpush1.bf16.msra.mxu0 %v1918
    %2484 = vmatprep.subr.bf16.mxu0 0
    %2485 = vmatpush1.bf16.msra.mxu0 %v1919
    %2486 = vmatprep.subr.bf16.mxu0 0
    %2487 = vmatpush1.bf16.msra.mxu0 %v1920
    %2488 = vmatprep.subr.bf16.mxu0 0
    %2489 = vmatpush1.bf16.msra.mxu0 %v1921
    %2490 = vmatprep.subr.bf16.mxu0 0
    %2491 = vmatpush1.bf16.msra.mxu0 %v1922
    %2492 = vmatprep.subr.bf16.mxu0 0
    %2493 = vmatpush1.bf16.msra.mxu0 %v1923
    %2494 = vmatprep.subr.bf16.mxu0 0
    %2495 = vmatpush1.bf16.msra.mxu0 %v1924
    %2496 = vmatprep.subr.bf16.mxu0 0
    %2497 = vmatpush1.bf16.msra.mxu0 %v1925
    %2498 = vmatprep.subr.bf16.mxu0 0
    %2499 = vmatpush1.bf16.msra.mxu0 %v1926
    %2500 = vmatprep.subr.bf16.mxu0 0
    %2501 = vmatpush1.bf16.msra.mxu0 %v1927
    %2502 = vmatprep.subr.bf16.mxu0 0
    %2503 = vmatpush1.bf16.msra.mxu0 %v1928
    %2504 = vmatprep.mubr.bf16.mxu0 %v633
    %2505 = vmatmul.mubr.bf16.gmra.mrb[0].mxu0 %v632
    %v2506 = vpop.f32.mrb[0].mxu0
    %v2507 = vadd.f32 %v2466, %v2506
    %v2508 = vpop.f32.mrb[0].mxu0
    %v2509 = vpop.f32.mrb[0].mxu0
    %v2510 = vadd.f32 %v2469, %v2509
    %v2511 = vpop.f32.mrb[0].mxu0
    %2512 = vdwg.mxu0
    %2513 = vmatprep.subr.bf16.mxu0 0
    %2514 = vmatpush1.bf16.msra.mxu0 %v1929
    %2515 = vmatprep.subr.bf16.mxu0 0
    %2516 = vmatpush1.bf16.msra.mxu0 %v1930
    %2517 = vmatprep.subr.bf16.mxu0 0
    %2518 = vmatpush1.bf16.msra.mxu0 %v1931
    %2519 = vmatprep.subr.bf16.mxu0 0
    %2520 = vmatpush1.bf16.msra.mxu0 %v1932
    %2521 = vmatprep.subr.bf16.mxu0 0
    %2522 = vmatpush1.bf16.msra.mxu0 %v1933
    %2523 = vmatprep.subr.bf16.mxu0 0
    %2524 = vmatpush1.bf16.msra.mxu0 %v1934
    %2525 = vmatprep.subr.bf16.mxu0 0
    %2526 = vmatpush1.bf16.msra.mxu0 %v1935
    %2527 = vmatprep.subr.bf16.mxu0 0
    %2528 = vmatpush1.bf16.msra.mxu0 %v1936
    %2529 = vmatprep.subr.bf16.mxu0 0
    %2530 = vmatpush1.bf16.msra.mxu0 %v1937
    %2531 = vmatprep.subr.bf16.mxu0 0
    %2532 = vmatpush1.bf16.msra.mxu0 %v1938
    %2533 = vmatprep.subr.bf16.mxu0 0
    %2534 = vmatpush1.bf16.msra.mxu0 %v1939
    %2535 = vmatprep.subr.bf16.mxu0 0
    %2536 = vmatpush1.bf16.msra.mxu0 %v1940
    %2537 = vmatprep.subr.bf16.mxu0 0
    %2538 = vmatpush1.bf16.msra.mxu0 %v1941
    %2539 = vmatprep.subr.bf16.mxu0 0
    %2540 = vmatpush1.bf16.msra.mxu0 %v1942
    %2541 = vmatprep.subr.bf16.mxu0 0
    %2542 = vmatpush1.bf16.msra.mxu0 %v1943
    %2543 = vmatprep.subr.bf16.mxu0 0
    %2544 = vmatpush1.bf16.msra.mxu0 %v1944
    %2545 = vmatprep.mubr.bf16.mxu0 %v635
    %2546 = vmatmul.mubr.bf16.gmra.mrb[0].mxu0 %v634
    %v2547 = vpop.f32.mrb[0].mxu0
    %v2548 = vadd.f32 %v2507, %v2547
    %v2549 = vpop.f32.mrb[0].mxu0
    %v2550 = vpop.f32.mrb[0].mxu0
    %v2551 = vadd.f32 %v2510, %v2550
    %v2552 = vpop.f32.mrb[0].mxu0
    %2553 = vdwg.mxu0
    %2554 = vmatprep.subr.bf16.mxu0 0
    %2555 = vmatpush1.bf16.msra.mxu0 %v1945
    %2556 = vmatprep.subr.bf16.mxu0 0
    %2557 = vmatpush1.bf16.msra.mxu0 %v1946
    %2558 = vmatprep.subr.bf16.mxu0 0
    %2559 = vmatpush1.bf16.msra.mxu0 %v1947
    %2560 = vmatprep.subr.bf16.mxu0 0
    %2561 = vmatpush1.bf16.msra.mxu0 %v1948
    %2562 = vmatprep.subr.bf16.mxu0 0
    %2563 = vmatpush1.bf16.msra.mxu0 %v1949
    %2564 = vmatprep.subr.bf16.mxu0 0
    %2565 = vmatpush1.bf16.msra.mxu0 %v1950
    %2566 = vmatprep.subr.bf16.mxu0 0
    %2567 = vmatpush1.bf16.msra.mxu0 %v1951
    %2568 = vmatprep.subr.bf16.mxu0 0
    %2569 = vmatpush1.bf16.msra.mxu0 %v1952
    %2570 = vmatprep.subr.bf16.mxu0 0
    %2571 = vmatpush1.bf16.msra.mxu0 %v1953
    %2572 = vmatprep.subr.bf16.mxu0 0
    %2573 = vmatpush1.bf16.msra.mxu0 %v1954
    %2574 = vmatprep.subr.bf16.mxu0 0
    %2575 = vmatpush1.bf16.msra.mxu0 %v1955
    %2576 = vmatprep.subr.bf16.mxu0 0
    %2577 = vmatpush1.bf16.msra.mxu0 %v1956
    %2578 = vmatprep.subr.bf16.mxu0 0
    %2579 = vmatpush1.bf16.msra.mxu0 %v1957
    %2580 = vmatprep.subr.bf16.mxu0 0
    %2581 = vmatpush1.bf16.msra.mxu0 %v1958
    %2582 = vmatprep.subr.bf16.mxu0 0
    %2583 = vmatpush1.bf16.msra.mxu0 %v1959
    %2584 = vmatprep.subr.bf16.mxu0 0
    %2585 = vmatpush1.bf16.msra.mxu0 %v1960
    %2586 = vmatprep.mubr.bf16.mxu0 %v637
    %2587 = vmatmul.mubr.bf16.gmra.mrb[0].mxu0 %v636
    %v2588 = vpop.f32.mrb[0].mxu0
    %v2589 = vadd.f32 %v2548, %v2588
    %v2590 = vpop.f32.mrb[0].mxu0
    %v2591 = vpop.f32.mrb[0].mxu0
    %v2592 = vadd.f32 %v2551, %v2591
    %v2593 = vpop.f32.mrb[0].mxu0
    %2594 = vdwg.mxu0
    %2595 = vmatprep.subr.bf16.mxu0 0
    %2596 = vmatpush1.bf16.msra.mxu0 %v1961
    %2597 = vmatprep.subr.bf16.mxu0 0
    %2598 = vmatpush1.bf16.msra.mxu0 %v1962
    %2599 = vmatprep.subr.bf16.mxu0 0
    %2600 = vmatpush1.bf16.msra.mxu0 %v1963
    %2601 = vmatprep.subr.bf16.mxu0 0
    %2602 = vmatpush1.bf16.msra.mxu0 %v1964
    %2603 = vmatprep.subr.bf16.mxu0 0
    %2604 = vmatpush1.bf16.msra.mxu0 %v1965
    %2605 = vmatprep.subr.bf16.mxu0 0
    %2606 = vmatpush1.bf16.msra.mxu0 %v1966
    %2607 = vmatprep.subr.bf16.mxu0 0
    %2608 = vmatpush1.bf16.msra.mxu0 %v1967
    %2609 = vmatprep.subr.bf16.mxu0 0
    %2610 = vmatpush1.bf16.msra.mxu0 %v1968
    %2611 = vmatprep.subr.bf16.mxu0 0
    %2612 = vmatpush1.bf16.msra.mxu0 %v1969
    %2613 = vmatprep.subr.bf16.mxu0 0
    %2614 = vmatpush1.bf16.msra.mxu0 %v1970
    %2615 = vmatprep.subr.bf16.mxu0 0
    %2616 = vmatpush1.bf16.msra.mxu0 %v1971
    %2617 = vmatprep.subr.bf16.mxu0 0
    %2618 = vmatpush1.bf16.msra.mxu0 %v1972
    %2619 = vmatprep.subr.bf16.mxu0 0
    %2620 = vmatpush1.bf16.msra.mxu0 %v1973
    %2621 = vmatprep.subr.bf16.mxu0 0
    %2622 = vmatpush1.bf16.msra.mxu0 %v1974
    %2623 = vmatprep.subr.bf16.mxu0 0
    %2624 = vmatpush1.bf16.msra.mxu0 %v1975
    %2625 = vmatprep.subr.bf16.mxu0 0
    %2626 = vmatpush1.bf16.msra.mxu0 %v1976
    %2627 = vmatprep.mubr.bf16.mxu0 %v639
    %2628 = vmatmul.mubr.bf16.gmra.mrb[0].mxu0 %v638
    %v2629 = vpop.f32.mrb[0].mxu0
    %v2630 = vadd.f32 %v2589, %v2629
    %v2631 = vpop.f32.mrb[0].mxu0
    %v2632 = vpop.f32.mrb[0].mxu0
    %v2633 = vadd.f32 %v2592, %v2632
    %v2634 = vpop.f32.mrb[0].mxu0
    %2635 = vdwg.mxu0
    %2636 = vmatprep.subr.bf16.mxu0 0
    %2637 = vmatpush1.bf16.msra.mxu0 %v1977
    %2638 = vmatprep.subr.bf16.mxu0 0
    %2639 = vmatpush1.bf16.msra.mxu0 %v1978
    %2640 = vmatprep.subr.bf16.mxu0 0
    %2641 = vmatpush1.bf16.msra.mxu0 %v1979
    %2642 = vmatprep.subr.bf16.mxu0 0
    %2643 = vmatpush1.bf16.msra.mxu0 %v1980
    %2644 = vmatprep.subr.bf16.mxu0 0
    %2645 = vmatpush1.bf16.msra.mxu0 %v1981
    %2646 = vmatprep.subr.bf16.mxu0 0
    %2647 = vmatpush1.bf16.msra.mxu0 %v1982
    %2648 = vmatprep.subr.bf16.mxu0 0
    %2649 = vmatpush1.bf16.msra.mxu0 %v1983
    %2650 = vmatprep.subr.bf16.mxu0 0
    %2651 = vmatpush1.bf16.msra.mxu0 %v1984
    %2652 = vmatprep.subr.bf16.mxu0 0
    %2653 = vmatpush1.bf16.msra.mxu0 %v1985
    %2654 = vmatprep.subr.bf16.mxu0 0
    %2655 = vmatpush1.bf16.msra.mxu0 %v1986
    %2656 = vmatprep.subr.bf16.mxu0 0
    %2657 = vmatpush1.bf16.msra.mxu0 %v1987
    %2658 = vmatprep.subr.bf16.mxu0 0
    %2659 = vmatpush1.bf16.msra.mxu0 %v1988
    %2660 = vmatprep.subr.bf16.mxu0 0
    %2661 = vmatpush1.bf16.msra.mxu0 %v1989
    %2662 = vmatprep.subr.bf16.mxu0 0
    %2663 = vmatpush1.bf16.msra.mxu0 %v1990
    %2664 = vmatprep.subr.bf16.mxu0 0
    %2665 = vmatpush1.bf16.msra.mxu0 %v1991
    %2666 = vmatprep.subr.bf16.mxu0 0
    %2667 = vmatpush1.bf16.msra.mxu0 %v1992
    %2668 = vmatprep.mubr.bf16.mxu0 %v641
    %2669 = vmatmul.mubr.bf16.gmra.mrb[0].mxu0 %v640
    %v2670 = vpop.f32.mrb[0].mxu0
    %v2671 = vadd.f32 %v2630, %v2670
    %v2672 = vpop.f32.mrb[0].mxu0
    %v2673 = vpop.f32.mrb[0].mxu0
    %v2674 = vadd.f32 %v2633, %v2673
    %v2675 = vpop.f32.mrb[0].mxu0
    %2676 = vdwg.mxu0
    %v2677 = vmax.f32 %v2671, 0.0
    %v2678 = vmax.f32 %v2674, 0.0
    %v2679 = vpack.c.bf16 %v2678, %v2677
    %v2680 = vld [vmem:[%s3] sm:$0xf]
    %v2681 = vld [vmem:[%s3 + $0x4] sm:$0xf]
    %v2682 = vld [vmem:[%s3 + $0x8] sm:$0xf]
    %v2683 = vld [vmem:[%s3 + $0xc] sm:$0xf]
    %v2684 = vld [vmem:[%s3 + $0x10] sm:$0xf]
    %v2685 = vld [vmem:[%s3 + $0x14] sm:$0xf]
    %v2686 = vld [vmem:[%s3 + $0x18] sm:$0xf]
    %v2687 = vld [vmem:[%s3 + $0x1c] sm:$0xf]
    %v2688 = vld [vmem:[%s3 + $0x20] sm:$0xf]
    %v2689 = vld [vmem:[%s3 + $0x24] sm:$0xf]
    %v2690 = vld [vmem:[%s3 + $0x28] sm:$0xf]
    %v2691 = vld [vmem:[%s3 + $0x2c] sm:$0xf]
    %v2692 = vld [vmem:[%s3 + $0x30] sm:$0xf]
    %v2693 = vld [vmem:[%s3 + $0x34] sm:$0xf]
    %v2694 = vld [vmem:[%s3 + $0x38] sm:$0xf]
    %v2695 = vld [vmem:[%s3 + $0x3c] sm:$0xf]
    %v2696 = vld [vmem:[%s4] sm:$0x1]
    %v2698 = vlaneseq
    %v2699 = vshrl.u32 %v2698, 7
    %v2700 = vsub.s32 0, %v2699
    %v2701 = vrot.slane %v2696, %v2700
    %v2719 = vunpack.c.l.b16 %v2680
    %v2720 = vunpack.c.l.b16 %v2681
    %v2721 = vunpack.c.l.b16 %v2682
    %v2722 = vunpack.c.l.b16 %v2683
    %v2723 = vunpack.c.l.b16 %v2684
    %v2724 = vunpack.c.l.b16 %v2685
    %v2725 = vunpack.c.l.b16 %v2686
    %v2726 = vunpack.c.l.b16 %v2687
    %v2727 = vunpack.c.l.b16 %v2688
    %v2728 = vunpack.c.l.b16 %v2689
    %v2729 = vunpack.c.l.b16 %v2690
    %v2730 = vunpack.c.l.b16 %v2691
    %v2731 = vunpack.c.l.b16 %v2692
    %v2732 = vunpack.c.l.b16 %v2693
    %v2733 = vunpack.c.l.b16 %v2694
    %v2734 = vunpack.c.l.b16 %v2695
    %v2735 = vpack.c.b16 %v2720, %v2719
    %v2736 = vpack.c.b16 %v2722, %v2721
    %v2737 = vpack.c.b16 %v2724, %v2723
    %v2738 = vpack.c.b16 %v2726, %v2725
    %v2739 = vpack.c.b16 %v2728, %v2727
    %v2740 = vpack.c.b16 %v2730, %v2729
    %v2741 = vpack.c.b16 %v2732, %v2731
    %v2742 = vpack.c.b16 %v2734, %v2733
    %2751 = vmatprep.subr.bf16.mxu0 0
    %2752 = vmatpush1.bf16.msra.mxu0 %v2735
    %2753 = vmatprep.subr.bf16.mxu0 0
    %2754 = vmatpush1.bf16.msra.mxu0 %v2736
    %2755 = vmatprep.subr.bf16.mxu0 0
    %2756 = vmatpush1.bf16.msra.mxu0 %v2737
    %2757 = vmatprep.subr.bf16.mxu0 0
    %2758 = vmatpush1.bf16.msra.mxu0 %v2738
    %2759 = vmatprep.subr.bf16.mxu0 0
    %2760 = vmatpush1.bf16.msra.mxu0 %v2739
    %2761 = vmatprep.subr.bf16.mxu0 0
    %2762 = vmatpush1.bf16.msra.mxu0 %v2740
    %2763 = vmatprep.subr.bf16.mxu0 0
    %2764 = vmatpush1.bf16.msra.mxu0 %v2741
    %2765 = vmatprep.subr.bf16.mxu0 0
    %2766 = vmatpush1.bf16.msra.mxu0 %v2742
    %2767 = vmatprep.subr.bf16.mxu0 0
    %2768 = vmatpush1.bf16.msra.mxu0 0
    %2769 = vmatprep.subr.bf16.mxu0 0
    %2770 = vmatpush1.bf16.msra.mxu0 0
    %2771 = vmatprep.subr.bf16.mxu0 0
    %2772 = vmatpush1.bf16.msra.mxu0 0
    %2773 = vmatprep.subr.bf16.mxu0 0
    %2774 = vmatpush1.bf16.msra.mxu0 0
    %2775 = vmatprep.subr.bf16.mxu0 0
    %2776 = vmatpush1.bf16.msra.mxu0 0
    %2777 = vmatprep.subr.bf16.mxu0 0
    %2778 = vmatpush1.bf16.msra.mxu0 0
    %2779 = vmatprep.subr.bf16.mxu0 0
    %2780 = vmatpush1.bf16.msra.mxu0 0
    %2781 = vmatprep.subr.bf16.mxu0 0
    %2782 = vmatpush1.bf16.msra.mxu0 0
    %2783 = vmatprep.mubr.bf16.mxu0 0
    %2784 = vmatmul.mubr.bf16.gmra.mrb[0].mxu0 %v2679
    %v2785 = vpop.f32.mrb[0].mxu0
    %v2786 = vadd.f32 %v2701, %v2785
    %v2787 = vpop.f32.mrb[0].mxu0
    %v2788 = vpop.f32.mrb[0].mxu0
    %v2789 = vadd.f32 %v2701, %v2788
    %v2790 = vpop.f32.mrb[0].mxu0
    %2791 = vdwg.mxu0
    %v2792 = vmax.f32 %v2786, 0.0
    %v2793 = vmax.f32 %v2789, 0.0
    %v2794 = vpack.c.bf16 %v2793, %v2792
    %v2795 = vld [vmem:[%s5] sm:$0xf]
    %v2796 = vld [vmem:[%s5 + $0x4] sm:$0xf]
    %v2797 = vld [vmem:[%s5 + $0x8] sm:$0xf]
    %v2798 = vld [vmem:[%s5 + $0xc] sm:$0xf]
    %v2799 = vld [vmem:[%s5 + $0x10] sm:$0xf]
    %v2800 = vld [vmem:[%s5 + $0x14] sm:$0xf]
    %v2801 = vld [vmem:[%s5 + $0x18] sm:$0xf]
    %v2802 = vld [vmem:[%s5 + $0x1c] sm:$0xf]
    %v2803 = vld [vmem:[%s6] sm:$0x1]
    %v2805 = vlaneseq
    %v2806 = vshrl.u32 %v2805, 7
    %v2807 = vsub.s32 0, %v2806
    %v2808 = vrot.slane %v2803, %v2807
    %v2818 = vunpack.c.l.b16 %v2795
    %v2819 = vunpack.c.l.b16 %v2796
    %v2820 = vunpack.c.l.b16 %v2797
    %v2821 = vunpack.c.l.b16 %v2798
    %v2822 = vunpack.c.l.b16 %v2799
    %v2823 = vunpack.c.l.b16 %v2800
    %v2824 = vunpack.c.l.b16 %v2801
    %v2825 = vunpack.c.l.b16 %v2802
    %v2826 = vpack.c.b16 %v2819, %v2818
    %v2827 = vpack.c.b16 %v2821, %v2820
    %v2828 = vpack.c.b16 %v2823, %v2822
    %v2829 = vpack.c.b16 %v2825, %v2824
    %vm2834 = vcmask 523264
    %v2836 = vsel %vm2834, %v2794, 0
    %2838 = vmatprep.subr.bf16.mxu0 0
    %2839 = vmatpush1.bf16.msra.mxu0 %v2826
    %2840 = vmatprep.subr.bf16.mxu0 0
    %2841 = vmatpush1.bf16.msra.mxu0 %v2827
    %2842 = vmatprep.subr.bf16.mxu0 0
    %2843 = vmatpush1.bf16.msra.mxu0 %v2828
    %2844 = vmatprep.subr.bf16.mxu0 0
    %2845 = vmatpush1.bf16.msra.mxu0 %v2829
    %2846 = vmatprep.subr.bf16.mxu0 0
    %2847 = vmatpush1.bf16.msra.mxu0 0
    %2848 = vmatprep.subr.bf16.mxu0 0
    %2849 = vmatpush1.bf16.msra.mxu0 0
    %2850 = vmatprep.subr.bf16.mxu0 0
    %2851 = vmatpush1.bf16.msra.mxu0 0
    %2852 = vmatprep.subr.bf16.mxu0 0
    %2853 = vmatpush1.bf16.msra.mxu0 0
    %2854 = vmatprep.subr.bf16.mxu0 0
    %2855 = vmatpush1.bf16.msra.mxu0 0
    %2856 = vmatprep.subr.bf16.mxu0 0
    %2857 = vmatpush1.bf16.msra.mxu0 0
    %2858 = vmatprep.subr.bf16.mxu0 0
    %2859 = vmatpush1.bf16.msra.mxu0 0
    %2860 = vmatprep.subr.bf16.mxu0 0
    %2861 = vmatpush1.bf16.msra.mxu0 0
    %2862 = vmatprep.subr.bf16.mxu0 0
    %2863 = vmatpush1.bf16.msra.mxu0 0
    %2864 = vmatprep.subr.bf16.mxu0 0
    %2865 = vmatpush1.bf16.msra.mxu0 0
    %2866 = vmatprep.subr.bf16.mxu0 0
    %2867 = vmatpush1.bf16.msra.mxu0 0
    %2868 = vmatprep.subr.bf16.mxu0 0
    %2869 = vmatpush1.bf16.msra.mxu0 0
    %2870 = vmatprep.mubr.bf16.mxu0 0
    %2871 = vmatmul.mubr.bf16.gmra.mrb[0].mxu0 %v2836
    %v2872 = vpop.f32.mrb[0].mxu0
    %v2873 = vadd.f32 %v2808, %v2872
    %v2874 = vpop.f32.mrb[0].mxu0
    %v2875 = vpop.f32.mrb[0].mxu0
    %v2876 = vadd.f32 %v2808, %v2875
    %v2877 = vpop.f32.mrb[0].mxu0
    %2878 = vdwg.mxu0
    %2879 = vst [vmem:[#allocation5] sm:$0xff] %v2873
    %2880 = vst [vmem:[#allocation5 + $0x8] sm:$0xff] %v2876
    // Predicated region
    $region34: #{tpu_custom_call.1} parent=1 // pred_check
      _
    $region35: #{tpu_custom_call.1} parent=1 // pred_check_branch
      %2882 = sbr.rel (0) target = $region37
    $region36: #{tpu_custom_call.1} parent=1 // pred_region
      %s2884 = ssub.s32 256, 32
      %2885 = vsyncadd [#allocation4], %s2884
      %s2886 = sshll.u32 [#allocation5], 4
      %s2887 = int_to_ptr.vmem [resolvable:$true] %s2886
      %2892 = dma.vmem_to_hbm [thread:$0]  %s2887, 32, %s7, [#allocation4], 32, 32, 2
    $region37: #{tpu_custom_call.1} parent=1 // pred_fallthru
      _
    // Predicated region
    $region38: #{tpu_custom_call.1} parent=1 // pred_check
      _
    $region39: #{tpu_custom_call.1} parent=1 // pred_check_branch
      %2894 = sbr.rel (0) target = $region41
    $region40: #{tpu_custom_call.1} parent=1 // pred_region
      %2895 = dma.done [#allocation4], 256
    $region41: #{tpu_custom_call.1} parent=1 // pred_fallthru
      _
    %2896 = vsyncpa [#allocation3], 1
    %2897 = vsyncpa [#allocation4], 1

</llo_original>
